<compile_context>
chip_gen: v5e
topology: v5e:2x2
jax: 0.10.0
libtpu: 0.0.40
codegen_flags: <defaults>
</compile_context>

<pallas_src>
import functools

import jax
import jax.numpy as jnp
from jax.experimental import pallas as pl
from jax.experimental.pallas import tpu as pltpu

LEAKY_SLOPE = 0.2


# ----------------------------- fused Pallas kernel -------------------------- #

def _leaky(v):
    return jnp.where(v > 0, v, LEAKY_SLOPE * v)


def _res(h, w1, b1, w2, b2):
    """ResBlock_Disc: residual pointwise MLP over d_model.  h: [C, D]."""
    t = _leaky(jnp.dot(h, w1[...], preferred_element_type=jnp.float32) + b1[...])
    t = jnp.dot(t, w2[...], preferred_element_type=jnp.float32) + b2[...]
    return h + t


def _fused_disc_kernel(*refs, n_down, n_up):
    """One batch element per grid step; everything stays in VMEM.

    refs = (x, emb_w, emb_b,
            [res_w1, res_b1, res_w2, res_b2, down_w, down_b] * n_down,
            med_w1, med_b1, med_w2, med_b2,
            [up_w, up_b, res_w1, res_b1, res_w2, res_b2] * n_up,
            projD_w, projD_b, projM_w, projM_b,
            D_out, M_out)
    """
    in_refs = refs[:-2]
    d_out_ref, m_out_ref = refs[-2], refs[-1]

    it = iter(in_refs)
    x_ref = next(it)
    emb_w, emb_b = next(it), next(it)
    down = [tuple(next(it) for _ in range(6)) for _ in range(n_down)]
    med = tuple(next(it) for _ in range(4))
    up = [tuple(next(it) for _ in range(6)) for _ in range(n_up)]
    projD_w, projD_b, projM_w, projM_b = next(it), next(it), next(it), next(it)

    # Disc_embedding (MusEmbedding): value projection dec_in -> d_model
    x = x_ref[0]                                                     # [L, dec_in]
    h = jnp.dot(x, emb_w[...], preferred_element_type=jnp.float32) + emb_b[...]  # [L, D]

    # UNet down path: res-block then channel-mix downsample (pred_len axis)
    skips = []
    for (w1, b1, w2, b2, dw, db) in down:
        h = _res(h, w1, b1, w2, b2)
        skips.append(h)
        h = _leaky(jnp.dot(dw[...], h, preferred_element_type=jnp.float32) + db[...])

    # median block at the bottleneck resolution
    m = _res(h, med[0], med[1], med[2], med[3])

    # up path: channel-mix upsample, additive skip, res-block (skip-add fused here)
    u = m
    for j, (uw, ub, w1, b1, w2, b2) in enumerate(up):
        u = _leaky(jnp.dot(uw[...], u, preferred_element_type=jnp.float32) + ub[...])
        u = u + skips[-(j + 1)]  # TODO(synk): skip merge style (add) guessed from UNet convention
        u = _res(u, w1, b1, w2, b2)

    # final projections (fused into the same kernel)
    d_out_ref[0] = (jnp.dot(u, projD_w[...], preferred_element_type=jnp.float32)
                    + projD_b[...]).astype(d_out_ref.dtype)
    m_out_ref[0] = (jnp.dot(m, projM_w[...], preferred_element_type=jnp.float32)
                    + projM_b[...]).astype(m_out_ref.dtype)


# ----------------------------- parameters ----------------------------------- #

class Cfg:
    pred_len = 16
    dec_in = 4
    d_model = 32
    d_layers = 2
    g_layers = 2       # median block created when i == g_layers - 1
    stride_d = 2
    scale_factor = 2
    dropout = 0.0      # TODO(synk): dropout is a no-op at inference; not modeled
    input_dim = 4


def _dense_init(key, shape, scale=0.05):
    return (scale * jax.random.normal(key, shape)).astype(jnp.float32)


def _res_params(key, d_model):
    k1, k2 = jax.random.split(key)
    return {"w1": _dense_init(k1, (d_model, d_model)),
            "b1": jnp.zeros((d_model,), jnp.float32),
            "w2": _dense_init(k2, (d_model, d_model)),
            "b2": jnp.zeros((d_model,), jnp.float32)}


def init_disc_params(key, cfg):
    keys = jax.random.split(key, 64)
    ki = iter(keys)
    params = {}
    params["emb_w"] = _dense_init(next(ki), (cfg.dec_in, cfg.d_model))
    params["emb_b"] = jnp.zeros((cfg.d_model,), jnp.float32)

    # down path: channels pred_len -> pred_len/stride -> ...
    down = []
    for i in range(cfg.d_layers):
        out_ch = cfg.pred_len if i == 0 else cfg.pred_len // cfg.stride_d ** i
        blk = {"res": _res_params(next(ki), cfg.d_model),
               "down_w": _dense_init(next(ki), (out_ch // cfg.stride_d, out_ch)),
               "down_b": jnp.zeros((out_ch // cfg.stride_d,), jnp.float32)}
        down.append(blk)
    params["down"] = down

    # median block at the bottleneck resolution
    m_ch = cfg.pred_len // cfg.stride_d ** cfg.d_layers
    params["median"] = {"res": _res_params(next(ki), cfg.d_model)}
    params["m_channels"] = m_ch

    # up path: channels m_ch -> m_ch*stride -> ... -> pred_len
    up = []
    for i in reversed(range(cfg.d_layers)):
        in_ch = (cfg.pred_len // cfg.stride_d if i == 0
                 else cfg.pred_len // cfg.stride_d ** (i + 1))
        out_ch = in_ch * cfg.stride_d
        blk = {"up_w": _dense_init(next(ki), (out_ch, in_ch)),
               "up_b": jnp.zeros((out_ch,), jnp.float32),
               "res": _res_params(next(ki), cfg.d_model)}
        up.append(blk)
    params["up"] = up

    params["projD_w"] = _dense_init(next(ki), (cfg.d_model, cfg.input_dim))
    params["projD_b"] = jnp.zeros((cfg.input_dim,), jnp.float32)
    params["projM_w"] = _dense_init(next(ki), (cfg.d_model, cfg.input_dim))
    params["projM_b"] = jnp.zeros((cfg.input_dim,), jnp.float32)
    return params


# ------------------------------- forward ------------------------------------ #

def disc_forward(params, cfg, x):
    """x: [B, pred_len, dec_in] -> (D_out [B, pred_len, input_dim],
                                    M_out [B, pred_len//stride^d_layers, input_dim])."""
    B, L, _ = x.shape
    D = cfg.d_model
    m_ch = cfg.pred_len // cfg.stride_d ** cfg.d_layers

    # Flatten params into the kernel's positional order (biases as 2-D slabs).
    flat = [params["emb_w"], params["emb_b"].reshape(1, D)]
    for blk in params["down"]:
        r = blk["res"]
        flat += [r["w1"], r["b1"].reshape(1, D), r["w2"], r["b2"].reshape(1, D),
                 blk["down_w"], blk["down_b"].reshape(-1, 1)]
    r = params["median"]["res"]
    flat += [r["w1"], r["b1"].reshape(1, D), r["w2"], r["b2"].reshape(1, D)]
    for blk in params["up"]:
        r = blk["res"]
        flat += [blk["up_w"], blk["up_b"].reshape(-1, 1),
                 r["w1"], r["b1"].reshape(1, D), r["w2"], r["b2"].reshape(1, D)]
    flat += [params["projD_w"], params["projD_b"].reshape(1, -1),
             params["projM_w"], params["projM_b"].reshape(1, -1)]

    def const_spec(a):
        nd = a.ndim
        return pl.BlockSpec(a.shape, lambda b, _n=nd: (0,) * _n)

    in_specs = [pl.BlockSpec((1, L, cfg.dec_in), lambda b: (b, 0, 0))]
    in_specs += [const_spec(a) for a in flat]

    out_specs = [pl.BlockSpec((1, L, cfg.input_dim), lambda b: (b, 0, 0)),
                 pl.BlockSpec((1, m_ch, cfg.input_dim), lambda b: (b, 0, 0))]
    out_shape = (jax.ShapeDtypeStruct((B, L, cfg.input_dim), jnp.float32),
                 jax.ShapeDtypeStruct((B, m_ch, cfg.input_dim), jnp.float32))

    kernel = functools.partial(_fused_disc_kernel,
                               n_down=len(params["down"]),
                               n_up=len(params["up"]))

    D_out, M_out = pl.pallas_call(
        kernel,
        out_shape=out_shape,
        grid=(B,),
        in_specs=in_specs,
        out_specs=out_specs,
        compiler_params=pltpu.CompilerParams(
            dimension_semantics=("parallel",)),  # v7x: each TC takes one batch element
    )(x, *flat)
    return D_out, M_out


# --------------------------------- main -------------------------------------- #

if __name__ == "__main__":
    cfg = Cfg()
    key = jax.random.PRNGKey(0)
    kp, kx = jax.random.split(key)
    params = init_disc_params(kp, cfg)

    B = 2
    x = jax.random.normal(kx, (B, cfg.pred_len, cfg.dec_in), dtype=jnp.float32)

    D_out, M_out = disc_forward(params, cfg, x)
    jax.block_until_ready((D_out, M_out))

    assert D_out.shape == (B, cfg.pred_len, cfg.input_dim), D_out.shape
    assert M_out.shape == (B, cfg.pred_len // cfg.stride_d ** cfg.d_layers,
                           cfg.input_dim), M_out.shape
    print("KERNEL_OK")
</pallas_src>

<mosaic_0001>
module attributes {stable_mosaic.version = 11 : i64} {
  func.func @_fused_disc_kernel(%arg0: i32, %arg1: memref<1x16x4xf32, #tpu.memory_space<vmem>>, %arg2: memref<4x32xf32, #tpu.memory_space<vmem>>, %arg3: memref<1x32xf32, #tpu.memory_space<vmem>>, %arg4: memref<32x32xf32, #tpu.memory_space<vmem>>, %arg5: memref<1x32xf32, #tpu.memory_space<vmem>>, %arg6: memref<32x32xf32, #tpu.memory_space<vmem>>, %arg7: memref<1x32xf32, #tpu.memory_space<vmem>>, %arg8: memref<8x16xf32, #tpu.memory_space<vmem>>, %arg9: memref<8x1xf32, #tpu.memory_space<vmem>>, %arg10: memref<32x32xf32, #tpu.memory_space<vmem>>, %arg11: memref<1x32xf32, #tpu.memory_space<vmem>>, %arg12: memref<32x32xf32, #tpu.memory_space<vmem>>, %arg13: memref<1x32xf32, #tpu.memory_space<vmem>>, %arg14: memref<4x8xf32, #tpu.memory_space<vmem>>, %arg15: memref<4x1xf32, #tpu.memory_space<vmem>>, %arg16: memref<32x32xf32, #tpu.memory_space<vmem>>, %arg17: memref<1x32xf32, #tpu.memory_space<vmem>>, %arg18: memref<32x32xf32, #tpu.memory_space<vmem>>, %arg19: memref<1x32xf32, #tpu.memory_space<vmem>>, %arg20: memref<8x4xf32, #tpu.memory_space<vmem>>, %arg21: memref<8x1xf32, #tpu.memory_space<vmem>>, %arg22: memref<32x32xf32, #tpu.memory_space<vmem>>, %arg23: memref<1x32xf32, #tpu.memory_space<vmem>>, %arg24: memref<32x32xf32, #tpu.memory_space<vmem>>, %arg25: memref<1x32xf32, #tpu.memory_space<vmem>>, %arg26: memref<16x8xf32, #tpu.memory_space<vmem>>, %arg27: memref<16x1xf32, #tpu.memory_space<vmem>>, %arg28: memref<32x32xf32, #tpu.memory_space<vmem>>, %arg29: memref<1x32xf32, #tpu.memory_space<vmem>>, %arg30: memref<32x32xf32, #tpu.memory_space<vmem>>, %arg31: memref<1x32xf32, #tpu.memory_space<vmem>>, %arg32: memref<32x4xf32, #tpu.memory_space<vmem>>, %arg33: memref<1x4xf32, #tpu.memory_space<vmem>>, %arg34: memref<32x4xf32, #tpu.memory_space<vmem>>, %arg35: memref<1x4xf32, #tpu.memory_space<vmem>>, %arg36: memref<1x16x4xf32, #tpu.memory_space<vmem>>, %arg37: memref<1x4x4xf32, #tpu.memory_space<vmem>>) attributes {dimension_semantics = [#tpu.dimension_semantics<parallel>], iteration_bounds = array<i64: 2>, scalar_prefetch = 0 : i64, scratch_operands = 0 : i64, tpu.core_type = #tpu.core_type<tc>, window_params = [{transform_indices = @transform_0, window_bounds = array<i64: 1, 16, 4>}, {pipeline_mode = #tpu.pipeline_mode<synchronous>, transform_indices = @transform_1, window_bounds = array<i64: 4, 32>}, {pipeline_mode = #tpu.pipeline_mode<synchronous>, transform_indices = @transform_2, window_bounds = array<i64: 1, 32>}, {pipeline_mode = #tpu.pipeline_mode<synchronous>, transform_indices = @transform_3, window_bounds = array<i64: 32, 32>}, {pipeline_mode = #tpu.pipeline_mode<synchronous>, transform_indices = @transform_4, window_bounds = array<i64: 1, 32>}, {pipeline_mode = #tpu.pipeline_mode<synchronous>, transform_indices = @transform_5, window_bounds = array<i64: 32, 32>}, {pipeline_mode = #tpu.pipeline_mode<synchronous>, transform_indices = @transform_6, window_bounds = array<i64: 1, 32>}, {pipeline_mode = #tpu.pipeline_mode<synchronous>, transform_indices = @transform_7, window_bounds = array<i64: 8, 16>}, {pipeline_mode = #tpu.pipeline_mode<synchronous>, transform_indices = @transform_8, window_bounds = array<i64: 8, 1>}, {pipeline_mode = #tpu.pipeline_mode<synchronous>, transform_indices = @transform_9, window_bounds = array<i64: 32, 32>}, {pipeline_mode = #tpu.pipeline_mode<synchronous>, transform_indices = @transform_10, window_bounds = array<i64: 1, 32>}, {pipeline_mode = #tpu.pipeline_mode<synchronous>, transform_indices = @transform_11, window_bounds = array<i64: 32, 32>}, {pipeline_mode = #tpu.pipeline_mode<synchronous>, transform_indices = @transform_12, window_bounds = array<i64: 1, 32>}, {pipeline_mode = #tpu.pipeline_mode<synchronous>, transform_indices = @transform_13, window_bounds = array<i64: 4, 8>}, {pipeline_mode = #tpu.pipeline_mode<synchronous>, transform_indices = @transform_14, window_bounds = array<i64: 4, 1>}, {pipeline_mode = #tpu.pipeline_mode<synchronous>, transform_indices = @transform_15, window_bounds = array<i64: 32, 32>}, {pipeline_mode = #tpu.pipeline_mode<synchronous>, transform_indices = @transform_16, window_bounds = array<i64: 1, 32>}, {pipeline_mode = #tpu.pipeline_mode<synchronous>, transform_indices = @transform_17, window_bounds = array<i64: 32, 32>}, {pipeline_mode = #tpu.pipeline_mode<synchronous>, transform_indices = @transform_18, window_bounds = array<i64: 1, 32>}, {pipeline_mode = #tpu.pipeline_mode<synchronous>, transform_indices = @transform_19, window_bounds = array<i64: 8, 4>}, {pipeline_mode = #tpu.pipeline_mode<synchronous>, transform_indices = @transform_20, window_bounds = array<i64: 8, 1>}, {pipeline_mode = #tpu.pipeline_mode<synchronous>, transform_indices = @transform_21, window_bounds = array<i64: 32, 32>}, {pipeline_mode = #tpu.pipeline_mode<synchronous>, transform_indices = @transform_22, window_bounds = array<i64: 1, 32>}, {pipeline_mode = #tpu.pipeline_mode<synchronous>, transform_indices = @transform_23, window_bounds = array<i64: 32, 32>}, {pipeline_mode = #tpu.pipeline_mode<synchronous>, transform_indices = @transform_24, window_bounds = array<i64: 1, 32>}, {pipeline_mode = #tpu.pipeline_mode<synchronous>, transform_indices = @transform_25, window_bounds = array<i64: 16, 8>}, {pipeline_mode = #tpu.pipeline_mode<synchronous>, transform_indices = @transform_26, window_bounds = array<i64: 16, 1>}, {pipeline_mode = #tpu.pipeline_mode<synchronous>, transform_indices = @transform_27, window_bounds = array<i64: 32, 32>}, {pipeline_mode = #tpu.pipeline_mode<synchronous>, transform_indices = @transform_28, window_bounds = array<i64: 1, 32>}, {pipeline_mode = #tpu.pipeline_mode<synchronous>, transform_indices = @transform_29, window_bounds = array<i64: 32, 32>}, {pipeline_mode = #tpu.pipeline_mode<synchronous>, transform_indices = @transform_30, window_bounds = array<i64: 1, 32>}, {pipeline_mode = #tpu.pipeline_mode<synchronous>, transform_indices = @transform_31, window_bounds = array<i64: 32, 4>}, {pipeline_mode = #tpu.pipeline_mode<synchronous>, transform_indices = @transform_32, window_bounds = array<i64: 1, 4>}, {pipeline_mode = #tpu.pipeline_mode<synchronous>, transform_indices = @transform_33, window_bounds = array<i64: 32, 4>}, {pipeline_mode = #tpu.pipeline_mode<synchronous>, transform_indices = @transform_34, window_bounds = array<i64: 1, 4>}, {transform_indices = @transform_35, window_bounds = array<i64: 1, 16, 4>}, {transform_indices = @transform_36, window_bounds = array<i64: 1, 4, 4>}]} {
    %c0 = arith.constant 0 : index
    %c0_0 = arith.constant 0 : index
    %c0_1 = arith.constant 0 : index
    %0 = vector.load %arg1[%c0, %c0_0, %c0_1] : memref<1x16x4xf32, #tpu.memory_space<vmem>>, vector<1x16x4xf32>
    %1 = vector.shape_cast %0 : vector<1x16x4xf32> to vector<16x4xf32>
    %c0_2 = arith.constant 0 : index
    %c0_3 = arith.constant 0 : index
    %2 = vector.load %arg2[%c0_2, %c0_3] : memref<4x32xf32, #tpu.memory_space<vmem>>, vector<4x32xf32>
    %cst = arith.constant dense<0.000000e+00> : vector<16x32xf32>
    %3 = tpu.matmul %1, %2, %cst {dimension_numbers = #tpu.dot_dimension_numbers<[1], [0], [0], [1], [0, 0, 1, 1], [], []>} : vector<16x4xf32>, vector<4x32xf32>, vector<16x32xf32> -> vector<16x32xf32>
    %c0_4 = arith.constant 0 : index
    %c0_5 = arith.constant 0 : index
    %4 = vector.load %arg3[%c0_4, %c0_5] : memref<1x32xf32, #tpu.memory_space<vmem>>, vector<1x32xf32>
    %5 = vector.broadcast %4 : vector<1x32xf32> to vector<16x32xf32>
    %6 = arith.addf %3, %5 : vector<16x32xf32>
    %c0_6 = arith.constant 0 : index
    %c0_7 = arith.constant 0 : index
    %7 = vector.load %arg4[%c0_6, %c0_7] : memref<32x32xf32, #tpu.memory_space<vmem>>, vector<32x32xf32>
    %cst_8 = arith.constant dense<0.000000e+00> : vector<16x32xf32>
    %8 = tpu.matmul %6, %7, %cst_8 {dimension_numbers = #tpu.dot_dimension_numbers<[1], [0], [0], [1], [0, 0, 1, 1], [], []>} : vector<16x32xf32>, vector<32x32xf32>, vector<16x32xf32> -> vector<16x32xf32>
    %c0_9 = arith.constant 0 : index
    %c0_10 = arith.constant 0 : index
    %9 = vector.load %arg5[%c0_9, %c0_10] : memref<1x32xf32, #tpu.memory_space<vmem>>, vector<1x32xf32>
    %10 = vector.broadcast %9 : vector<1x32xf32> to vector<16x32xf32>
    %11 = arith.addf %8, %10 : vector<16x32xf32>
    %cst_11 = arith.constant 0.000000e+00 : f32
    %12 = vector.broadcast %cst_11 : f32 to vector<16x32xf32>
    %13 = arith.cmpf ogt, %11, %12 : vector<16x32xf32>
    %cst_12 = arith.constant 2.000000e-01 : f32
    %14 = vector.broadcast %cst_12 : f32 to vector<16x32xf32>
    %15 = arith.mulf %14, %11 : vector<16x32xf32>
    %16 = arith.select %13, %11, %15 : vector<16x32xi1>, vector<16x32xf32>
    %c0_13 = arith.constant 0 : index
    %c0_14 = arith.constant 0 : index
    %17 = vector.load %arg6[%c0_13, %c0_14] : memref<32x32xf32, #tpu.memory_space<vmem>>, vector<32x32xf32>
    %cst_15 = arith.constant dense<0.000000e+00> : vector<16x32xf32>
    %18 = tpu.matmul %16, %17, %cst_15 {dimension_numbers = #tpu.dot_dimension_numbers<[1], [0], [0], [1], [0, 0, 1, 1], [], []>} : vector<16x32xf32>, vector<32x32xf32>, vector<16x32xf32> -> vector<16x32xf32>
    %c0_16 = arith.constant 0 : index
    %c0_17 = arith.constant 0 : index
    %19 = vector.load %arg7[%c0_16, %c0_17] : memref<1x32xf32, #tpu.memory_space<vmem>>, vector<1x32xf32>
    %20 = vector.broadcast %19 : vector<1x32xf32> to vector<16x32xf32>
    %21 = arith.addf %18, %20 : vector<16x32xf32>
    %22 = arith.addf %6, %21 : vector<16x32xf32>
    %c0_18 = arith.constant 0 : index
    %c0_19 = arith.constant 0 : index
    %23 = vector.load %arg8[%c0_18, %c0_19] : memref<8x16xf32, #tpu.memory_space<vmem>>, vector<8x16xf32>
    %cst_20 = arith.constant dense<0.000000e+00> : vector<8x32xf32>
    %24 = tpu.matmul %23, %22, %cst_20 {dimension_numbers = #tpu.dot_dimension_numbers<[1], [0], [0], [1], [0, 0, 1, 1], [], []>} : vector<8x16xf32>, vector<16x32xf32>, vector<8x32xf32> -> vector<8x32xf32>
    %c0_21 = arith.constant 0 : index
    %c0_22 = arith.constant 0 : index
    %25 = vector.load %arg9[%c0_21, %c0_22] : memref<8x1xf32, #tpu.memory_space<vmem>>, vector<8x1xf32>
    %26 = vector.broadcast %25 : vector<8x1xf32> to vector<8x32xf32>
    %27 = arith.addf %24, %26 : vector<8x32xf32>
    %cst_23 = arith.constant 0.000000e+00 : f32
    %28 = vector.broadcast %cst_23 : f32 to vector<8x32xf32>
    %29 = arith.cmpf ogt, %27, %28 : vector<8x32xf32>
    %cst_24 = arith.constant 2.000000e-01 : f32
    %30 = vector.broadcast %cst_24 : f32 to vector<8x32xf32>
    %31 = arith.mulf %30, %27 : vector<8x32xf32>
    %32 = arith.select %29, %27, %31 : vector<8x32xi1>, vector<8x32xf32>
    %c0_25 = arith.constant 0 : index
    %c0_26 = arith.constant 0 : index
    %33 = vector.load %arg10[%c0_25, %c0_26] : memref<32x32xf32, #tpu.memory_space<vmem>>, vector<32x32xf32>
    %cst_27 = arith.constant dense<0.000000e+00> : vector<8x32xf32>
    %34 = tpu.matmul %32, %33, %cst_27 {dimension_numbers = #tpu.dot_dimension_numbers<[1], [0], [0], [1], [0, 0, 1, 1], [], []>} : vector<8x32xf32>, vector<32x32xf32>, vector<8x32xf32> -> vector<8x32xf32>
    %c0_28 = arith.constant 0 : index
    %c0_29 = arith.constant 0 : index
    %35 = vector.load %arg11[%c0_28, %c0_29] : memref<1x32xf32, #tpu.memory_space<vmem>>, vector<1x32xf32>
    %36 = vector.broadcast %35 : vector<1x32xf32> to vector<8x32xf32>
    %37 = arith.addf %34, %36 : vector<8x32xf32>
    %cst_30 = arith.constant 0.000000e+00 : f32
    %38 = vector.broadcast %cst_30 : f32 to vector<8x32xf32>
    %39 = arith.cmpf ogt, %37, %38 : vector<8x32xf32>
    %cst_31 = arith.constant 2.000000e-01 : f32
    %40 = vector.broadcast %cst_31 : f32 to vector<8x32xf32>
    %41 = arith.mulf %40, %37 : vector<8x32xf32>
    %42 = arith.select %39, %37, %41 : vector<8x32xi1>, vector<8x32xf32>
    %c0_32 = arith.constant 0 : index
    %c0_33 = arith.constant 0 : index
    %43 = vector.load %arg12[%c0_32, %c0_33] : memref<32x32xf32, #tpu.memory_space<vmem>>, vector<32x32xf32>
    %cst_34 = arith.constant dense<0.000000e+00> : vector<8x32xf32>
    %44 = tpu.matmul %42, %43, %cst_34 {dimension_numbers = #tpu.dot_dimension_numbers<[1], [0], [0], [1], [0, 0, 1, 1], [], []>} : vector<8x32xf32>, vector<32x32xf32>, vector<8x32xf32> -> vector<8x32xf32>
    %c0_35 = arith.constant 0 : index
    %c0_36 = arith.constant 0 : index
    %45 = vector.load %arg13[%c0_35, %c0_36] : memref<1x32xf32, #tpu.memory_space<vmem>>, vector<1x32xf32>
    %46 = vector.broadcast %45 : vector<1x32xf32> to vector<8x32xf32>
    %47 = arith.addf %44, %46 : vector<8x32xf32>
    %48 = arith.addf %32, %47 : vector<8x32xf32>
    %c0_37 = arith.constant 0 : index
    %c0_38 = arith.constant 0 : index
    %49 = vector.load %arg14[%c0_37, %c0_38] : memref<4x8xf32, #tpu.memory_space<vmem>>, vector<4x8xf32>
    %cst_39 = arith.constant dense<0.000000e+00> : vector<4x32xf32>
    %50 = tpu.matmul %49, %48, %cst_39 {dimension_numbers = #tpu.dot_dimension_numbers<[1], [0], [0], [1], [0, 0, 1, 1], [], []>} : vector<4x8xf32>, vector<8x32xf32>, vector<4x32xf32> -> vector<4x32xf32>
    %c0_40 = arith.constant 0 : index
    %c0_41 = arith.constant 0 : index
    %51 = vector.load %arg15[%c0_40, %c0_41] : memref<4x1xf32, #tpu.memory_space<vmem>>, vector<4x1xf32>
    %52 = vector.broadcast %51 : vector<4x1xf32> to vector<4x32xf32>
    %53 = arith.addf %50, %52 : vector<4x32xf32>
    %cst_42 = arith.constant 0.000000e+00 : f32
    %54 = vector.broadcast %cst_42 : f32 to vector<4x32xf32>
    %55 = arith.cmpf ogt, %53, %54 : vector<4x32xf32>
    %cst_43 = arith.constant 2.000000e-01 : f32
    %56 = vector.broadcast %cst_43 : f32 to vector<4x32xf32>
    %57 = arith.mulf %56, %53 : vector<4x32xf32>
    %58 = arith.select %55, %53, %57 : vector<4x32xi1>, vector<4x32xf32>
    %c0_44 = arith.constant 0 : index
    %c0_45 = arith.constant 0 : index
    %59 = vector.load %arg16[%c0_44, %c0_45] : memref<32x32xf32, #tpu.memory_space<vmem>>, vector<32x32xf32>
    %cst_46 = arith.constant dense<0.000000e+00> : vector<4x32xf32>
    %60 = tpu.matmul %58, %59, %cst_46 {dimension_numbers = #tpu.dot_dimension_numbers<[1], [0], [0], [1], [0, 0, 1, 1], [], []>} : vector<4x32xf32>, vector<32x32xf32>, vector<4x32xf32> -> vector<4x32xf32>
    %c0_47 = arith.constant 0 : index
    %c0_48 = arith.constant 0 : index
    %61 = vector.load %arg17[%c0_47, %c0_48] : memref<1x32xf32, #tpu.memory_space<vmem>>, vector<1x32xf32>
    %62 = vector.broadcast %61 : vector<1x32xf32> to vector<4x32xf32>
    %63 = arith.addf %60, %62 : vector<4x32xf32>
    %cst_49 = arith.constant 0.000000e+00 : f32
    %64 = vector.broadcast %cst_49 : f32 to vector<4x32xf32>
    %65 = arith.cmpf ogt, %63, %64 : vector<4x32xf32>
    %cst_50 = arith.constant 2.000000e-01 : f32
    %66 = vector.broadcast %cst_50 : f32 to vector<4x32xf32>
    %67 = arith.mulf %66, %63 : vector<4x32xf32>
    %68 = arith.select %65, %63, %67 : vector<4x32xi1>, vector<4x32xf32>
    %c0_51 = arith.constant 0 : index
    %c0_52 = arith.constant 0 : index
    %69 = vector.load %arg18[%c0_51, %c0_52] : memref<32x32xf32, #tpu.memory_space<vmem>>, vector<32x32xf32>
    %cst_53 = arith.constant dense<0.000000e+00> : vector<4x32xf32>
    %70 = tpu.matmul %68, %69, %cst_53 {dimension_numbers = #tpu.dot_dimension_numbers<[1], [0], [0], [1], [0, 0, 1, 1], [], []>} : vector<4x32xf32>, vector<32x32xf32>, vector<4x32xf32> -> vector<4x32xf32>
    %c0_54 = arith.constant 0 : index
    %c0_55 = arith.constant 0 : index
    %71 = vector.load %arg19[%c0_54, %c0_55] : memref<1x32xf32, #tpu.memory_space<vmem>>, vector<1x32xf32>
    %72 = vector.broadcast %71 : vector<1x32xf32> to vector<4x32xf32>
    %73 = arith.addf %70, %72 : vector<4x32xf32>
    %74 = arith.addf %58, %73 : vector<4x32xf32>
    %c0_56 = arith.constant 0 : index
    %c0_57 = arith.constant 0 : index
    %75 = vector.load %arg20[%c0_56, %c0_57] : memref<8x4xf32, #tpu.memory_space<vmem>>, vector<8x4xf32>
    %cst_58 = arith.constant dense<0.000000e+00> : vector<8x32xf32>
    %76 = tpu.matmul %75, %74, %cst_58 {dimension_numbers = #tpu.dot_dimension_numbers<[1], [0], [0], [1], [0, 0, 1, 1], [], []>} : vector<8x4xf32>, vector<4x32xf32>, vector<8x32xf32> -> vector<8x32xf32>
    %c0_59 = arith.constant 0 : index
    %c0_60 = arith.constant 0 : index
    %77 = vector.load %arg21[%c0_59, %c0_60] : memref<8x1xf32, #tpu.memory_space<vmem>>, vector<8x1xf32>
    %78 = vector.broadcast %77 : vector<8x1xf32> to vector<8x32xf32>
    %79 = arith.addf %76, %78 : vector<8x32xf32>
    %cst_61 = arith.constant 0.000000e+00 : f32
    %80 = vector.broadcast %cst_61 : f32 to vector<8x32xf32>
    %81 = arith.cmpf ogt, %79, %80 : vector<8x32xf32>
    %cst_62 = arith.constant 2.000000e-01 : f32
    %82 = vector.broadcast %cst_62 : f32 to vector<8x32xf32>
    %83 = arith.mulf %82, %79 : vector<8x32xf32>
    %84 = arith.select %81, %79, %83 : vector<8x32xi1>, vector<8x32xf32>
    %85 = arith.addf %84, %48 : vector<8x32xf32>
    %c0_63 = arith.constant 0 : index
    %c0_64 = arith.constant 0 : index
    %86 = vector.load %arg22[%c0_63, %c0_64] : memref<32x32xf32, #tpu.memory_space<vmem>>, vector<32x32xf32>
    %cst_65 = arith.constant dense<0.000000e+00> : vector<8x32xf32>
    %87 = tpu.matmul %85, %86, %cst_65 {dimension_numbers = #tpu.dot_dimension_numbers<[1], [0], [0], [1], [0, 0, 1, 1], [], []>} : vector<8x32xf32>, vector<32x32xf32>, vector<8x32xf32> -> vector<8x32xf32>
    %c0_66 = arith.constant 0 : index
    %c0_67 = arith.constant 0 : index
    %88 = vector.load %arg23[%c0_66, %c0_67] : memref<1x32xf32, #tpu.memory_space<vmem>>, vector<1x32xf32>
    %89 = vector.broadcast %88 : vector<1x32xf32> to vector<8x32xf32>
    %90 = arith.addf %87, %89 : vector<8x32xf32>
    %cst_68 = arith.constant 0.000000e+00 : f32
    %91 = vector.broadcast %cst_68 : f32 to vector<8x32xf32>
    %92 = arith.cmpf ogt, %90, %91 : vector<8x32xf32>
    %cst_69 = arith.constant 2.000000e-01 : f32
    %93 = vector.broadcast %cst_69 : f32 to vector<8x32xf32>
    %94 = arith.mulf %93, %90 : vector<8x32xf32>
    %95 = arith.select %92, %90, %94 : vector<8x32xi1>, vector<8x32xf32>
    %c0_70 = arith.constant 0 : index
    %c0_71 = arith.constant 0 : index
    %96 = vector.load %arg24[%c0_70, %c0_71] : memref<32x32xf32, #tpu.memory_space<vmem>>, vector<32x32xf32>
    %cst_72 = arith.constant dense<0.000000e+00> : vector<8x32xf32>
    %97 = tpu.matmul %95, %96, %cst_72 {dimension_numbers = #tpu.dot_dimension_numbers<[1], [0], [0], [1], [0, 0, 1, 1], [], []>} : vector<8x32xf32>, vector<32x32xf32>, vector<8x32xf32> -> vector<8x32xf32>
    %c0_73 = arith.constant 0 : index
    %c0_74 = arith.constant 0 : index
    %98 = vector.load %arg25[%c0_73, %c0_74] : memref<1x32xf32, #tpu.memory_space<vmem>>, vector<1x32xf32>
    %99 = vector.broadcast %98 : vector<1x32xf32> to vector<8x32xf32>
    %100 = arith.addf %97, %99 : vector<8x32xf32>
    %101 = arith.addf %85, %100 : vector<8x32xf32>
    %c0_75 = arith.constant 0 : index
    %c0_76 = arith.constant 0 : index
    %102 = vector.load %arg26[%c0_75, %c0_76] : memref<16x8xf32, #tpu.memory_space<vmem>>, vector<16x8xf32>
    %cst_77 = arith.constant dense<0.000000e+00> : vector<16x32xf32>
    %103 = tpu.matmul %102, %101, %cst_77 {dimension_numbers = #tpu.dot_dimension_numbers<[1], [0], [0], [1], [0, 0, 1, 1], [], []>} : vector<16x8xf32>, vector<8x32xf32>, vector<16x32xf32> -> vector<16x32xf32>
    %c0_78 = arith.constant 0 : index
    %c0_79 = arith.constant 0 : index
    %104 = vector.load %arg27[%c0_78, %c0_79] : memref<16x1xf32, #tpu.memory_space<vmem>>, vector<16x1xf32>
    %105 = vector.broadcast %104 : vector<16x1xf32> to vector<16x32xf32>
    %106 = arith.addf %103, %105 : vector<16x32xf32>
    %cst_80 = arith.constant 0.000000e+00 : f32
    %107 = vector.broadcast %cst_80 : f32 to vector<16x32xf32>
    %108 = arith.cmpf ogt, %106, %107 : vector<16x32xf32>
    %cst_81 = arith.constant 2.000000e-01 : f32
    %109 = vector.broadcast %cst_81 : f32 to vector<16x32xf32>
    %110 = arith.mulf %109, %106 : vector<16x32xf32>
    %111 = arith.select %108, %106, %110 : vector<16x32xi1>, vector<16x32xf32>
    %112 = arith.addf %111, %22 : vector<16x32xf32>
    %c0_82 = arith.constant 0 : index
    %c0_83 = arith.constant 0 : index
    %113 = vector.load %arg28[%c0_82, %c0_83] : memref<32x32xf32, #tpu.memory_space<vmem>>, vector<32x32xf32>
    %cst_84 = arith.constant dense<0.000000e+00> : vector<16x32xf32>
    %114 = tpu.matmul %112, %113, %cst_84 {dimension_numbers = #tpu.dot_dimension_numbers<[1], [0], [0], [1], [0, 0, 1, 1], [], []>} : vector<16x32xf32>, vector<32x32xf32>, vector<16x32xf32> -> vector<16x32xf32>
    %c0_85 = arith.constant 0 : index
    %c0_86 = arith.constant 0 : index
    %115 = vector.load %arg29[%c0_85, %c0_86] : memref<1x32xf32, #tpu.memory_space<vmem>>, vector<1x32xf32>
    %116 = vector.broadcast %115 : vector<1x32xf32> to vector<16x32xf32>
    %117 = arith.addf %114, %116 : vector<16x32xf32>
    %cst_87 = arith.constant 0.000000e+00 : f32
    %118 = vector.broadcast %cst_87 : f32 to vector<16x32xf32>
    %119 = arith.cmpf ogt, %117, %118 : vector<16x32xf32>
    %cst_88 = arith.constant 2.000000e-01 : f32
    %120 = vector.broadcast %cst_88 : f32 to vector<16x32xf32>
    %121 = arith.mulf %120, %117 : vector<16x32xf32>
    %122 = arith.select %119, %117, %121 : vector<16x32xi1>, vector<16x32xf32>
    %c0_89 = arith.constant 0 : index
    %c0_90 = arith.constant 0 : index
    %123 = vector.load %arg30[%c0_89, %c0_90] : memref<32x32xf32, #tpu.memory_space<vmem>>, vector<32x32xf32>
    %cst_91 = arith.constant dense<0.000000e+00> : vector<16x32xf32>
    %124 = tpu.matmul %122, %123, %cst_91 {dimension_numbers = #tpu.dot_dimension_numbers<[1], [0], [0], [1], [0, 0, 1, 1], [], []>} : vector<16x32xf32>, vector<32x32xf32>, vector<16x32xf32> -> vector<16x32xf32>
    %c0_92 = arith.constant 0 : index
    %c0_93 = arith.constant 0 : index
    %125 = vector.load %arg31[%c0_92, %c0_93] : memref<1x32xf32, #tpu.memory_space<vmem>>, vector<1x32xf32>
    %126 = vector.broadcast %125 : vector<1x32xf32> to vector<16x32xf32>
    %127 = arith.addf %124, %126 : vector<16x32xf32>
    %128 = arith.addf %112, %127 : vector<16x32xf32>
    %c0_94 = arith.constant 0 : index
    %c0_95 = arith.constant 0 : index
    %129 = vector.load %arg32[%c0_94, %c0_95] : memref<32x4xf32, #tpu.memory_space<vmem>>, vector<32x4xf32>
    %cst_96 = arith.constant dense<0.000000e+00> : vector<16x4xf32>
    %130 = tpu.matmul %128, %129, %cst_96 {dimension_numbers = #tpu.dot_dimension_numbers<[1], [0], [0], [1], [0, 0, 1, 1], [], []>} : vector<16x32xf32>, vector<32x4xf32>, vector<16x4xf32> -> vector<16x4xf32>
    %c0_97 = arith.constant 0 : index
    %c0_98 = arith.constant 0 : index
    %131 = vector.load %arg33[%c0_97, %c0_98] : memref<1x4xf32, #tpu.memory_space<vmem>>, vector<1x4xf32>
    %132 = vector.broadcast %131 : vector<1x4xf32> to vector<16x4xf32>
    %133 = arith.addf %130, %132 : vector<16x4xf32>
    %c0_99 = arith.constant 0 : index
    %c0_100 = arith.constant 0 : index
    %c0_101 = arith.constant 0 : index
    %134 = vector.load %arg36[%c0_99, %c0_100, %c0_101] : memref<1x16x4xf32, #tpu.memory_space<vmem>>, vector<1x16x4xf32>
    %135 = vector.shape_cast %134 : vector<1x16x4xf32> to vector<16x4xf32>
    %136 = vector.shape_cast %133 : vector<16x4xf32> to vector<1x16x4xf32>
    tpu.vector_store %arg36[%c0_99, %c0_100, %c0_101], %136 {strides = array<i32>} : memref<1x16x4xf32, #tpu.memory_space<vmem>>, vector<1x16x4xf32>,
    %c0_102 = arith.constant 0 : index
    %c0_103 = arith.constant 0 : index
    %137 = vector.load %arg34[%c0_102, %c0_103] : memref<32x4xf32, #tpu.memory_space<vmem>>, vector<32x4xf32>
    %cst_104 = arith.constant dense<0.000000e+00> : vector<4x4xf32>
    %138 = tpu.matmul %74, %137, %cst_104 {dimension_numbers = #tpu.dot_dimension_numbers<[1], [0], [0], [1], [0, 0, 1, 1], [], []>} : vector<4x32xf32>, vector<32x4xf32>, vector<4x4xf32> -> vector<4x4xf32>
    %c0_105 = arith.constant 0 : index
    %c0_106 = arith.constant 0 : index
    %139 = vector.load %arg35[%c0_105, %c0_106] : memref<1x4xf32, #tpu.memory_space<vmem>>, vector<1x4xf32>
    %140 = vector.broadcast %139 : vector<1x4xf32> to vector<4x4xf32>
    %141 = arith.addf %138, %140 : vector<4x4xf32>
    %c0_107 = arith.constant 0 : index
    %c0_108 = arith.constant 0 : index
    %c0_109 = arith.constant 0 : index
    %142 = vector.load %arg37[%c0_107, %c0_108, %c0_109] : memref<1x4x4xf32, #tpu.memory_space<vmem>>, vector<1x4x4xf32>
    %143 = vector.shape_cast %142 : vector<1x4x4xf32> to vector<4x4xf32>
    %144 = vector.shape_cast %141 : vector<4x4xf32> to vector<1x4x4xf32>
    tpu.vector_store %arg37[%c0_107, %c0_108, %c0_109], %144 {strides = array<i32>} : memref<1x4x4xf32, #tpu.memory_space<vmem>>, vector<1x4x4xf32>,
    return
  }
  func.func @transform_0(%arg0: i32) -> (i32, i32, i32) {
    %c0_i32 = arith.constant 0 : i32
    %c0_i32_0 = arith.constant 0 : i32
    %c0_i32_1 = arith.constant 0 : i32
    return %arg0, %c0_i32, %c0_i32_0 : i32, i32, i32
  }
  func.func @transform_1(%arg0: i32) -> (i32, i32) {
    %c0_i32 = arith.constant 0 : i32
    %c0_i32_0 = arith.constant 0 : i32
    %c0_i32_1 = arith.constant 0 : i32
    return %c0_i32, %c0_i32_0 : i32, i32
  }
  func.func @transform_2(%arg0: i32) -> (i32, i32) {
    %c0_i32 = arith.constant 0 : i32
    %c0_i32_0 = arith.constant 0 : i32
    %c0_i32_1 = arith.constant 0 : i32
    return %c0_i32, %c0_i32_0 : i32, i32
  }
  func.func @transform_3(%arg0: i32) -> (i32, i32) {
    %c0_i32 = arith.constant 0 : i32
    %c0_i32_0 = arith.constant 0 : i32
    %c0_i32_1 = arith.constant 0 : i32
    return %c0_i32, %c0_i32_0 : i32, i32
  }
  func.func @transform_4(%arg0: i32) -> (i32, i32) {
    %c0_i32 = arith.constant 0 : i32
    %c0_i32_0 = arith.constant 0 : i32
    %c0_i32_1 = arith.constant 0 : i32
    return %c0_i32, %c0_i32_0 : i32, i32
  }
  func.func @transform_5(%arg0: i32) -> (i32, i32) {
    %c0_i32 = arith.constant 0 : i32
    %c0_i32_0 = arith.constant 0 : i32
    %c0_i32_1 = arith.constant 0 : i32
    return %c0_i32, %c0_i32_0 : i32, i32
  }
  func.func @transform_6(%arg0: i32) -> (i32, i32) {
    %c0_i32 = arith.constant 0 : i32
    %c0_i32_0 = arith.constant 0 : i32
    %c0_i32_1 = arith.constant 0 : i32
    return %c0_i32, %c0_i32_0 : i32, i32
  }
  func.func @transform_7(%arg0: i32) -> (i32, i32) {
    %c0_i32 = arith.constant 0 : i32
    %c0_i32_0 = arith.constant 0 : i32
    %c0_i32_1 = arith.constant 0 : i32
    return %c0_i32, %c0_i32_0 : i32, i32
  }
  func.func @transform_8(%arg0: i32) -> (i32, i32) {
    %c0_i32 = arith.constant 0 : i32
    %c0_i32_0 = arith.constant 0 : i32
    %c0_i32_1 = arith.constant 0 : i32
    return %c0_i32, %c0_i32_0 : i32, i32
  }
  func.func @transform_9(%arg0: i32) -> (i32, i32) {
    %c0_i32 = arith.constant 0 : i32
    %c0_i32_0 = arith.constant 0 : i32
    %c0_i32_1 = arith.constant 0 : i32
    return %c0_i32, %c0_i32_0 : i32, i32
  }
  func.func @transform_10(%arg0: i32) -> (i32, i32) {
    %c0_i32 = arith.constant 0 : i32
    %c0_i32_0 = arith.constant 0 : i32
    %c0_i32_1 = arith.constant 0 : i32
    return %c0_i32, %c0_i32_0 : i32, i32
  }
  func.func @transform_11(%arg0: i32) -> (i32, i32) {
    %c0_i32 = arith.constant 0 : i32
    %c0_i32_0 = arith.constant 0 : i32
    %c0_i32_1 = arith.constant 0 : i32
    return %c0_i32, %c0_i32_0 : i32, i32
  }
  func.func @transform_12(%arg0: i32) -> (i32, i32) {
    %c0_i32 = arith.constant 0 : i32
    %c0_i32_0 = arith.constant 0 : i32
    %c0_i32_1 = arith.constant 0 : i32
    return %c0_i32, %c0_i32_0 : i32, i32
  }
  func.func @transform_13(%arg0: i32) -> (i32, i32) {
    %c0_i32 = arith.constant 0 : i32
    %c0_i32_0 = arith.constant 0 : i32
    %c0_i32_1 = arith.constant 0 : i32
    return %c0_i32, %c0_i32_0 : i32, i32
  }
  func.func @transform_14(%arg0: i32) -> (i32, i32) {
    %c0_i32 = arith.constant 0 : i32
    %c0_i32_0 = arith.constant 0 : i32
    %c0_i32_1 = arith.constant 0 : i32
    return %c0_i32, %c0_i32_0 : i32, i32
  }
  func.func @transform_15(%arg0: i32) -> (i32, i32) {
    %c0_i32 = arith.constant 0 : i32
    %c0_i32_0 = arith.constant 0 : i32
    %c0_i32_1 = arith.constant 0 : i32
    return %c0_i32, %c0_i32_0 : i32, i32
  }
  func.func @transform_16(%arg0: i32) -> (i32, i32) {
    %c0_i32 = arith.constant 0 : i32
    %c0_i32_0 = arith.constant 0 : i32
    %c0_i32_1 = arith.constant 0 : i32
    return %c0_i32, %c0_i32_0 : i32, i32
  }
  func.func @transform_17(%arg0: i32) -> (i32, i32) {
    %c0_i32 = arith.constant 0 : i32
    %c0_i32_0 = arith.constant 0 : i32
    %c0_i32_1 = arith.constant 0 : i32
    return %c0_i32, %c0_i32_0 : i32, i32
  }
  func.func @transform_18(%arg0: i32) -> (i32, i32) {
    %c0_i32 = arith.constant 0 : i32
    %c0_i32_0 = arith.constant 0 : i32
    %c0_i32_1 = arith.constant 0 : i32
    return %c0_i32, %c0_i32_0 : i32, i32
  }
  func.func @transform_19(%arg0: i32) -> (i32, i32) {
    %c0_i32 = arith.constant 0 : i32
    %c0_i32_0 = arith.constant 0 : i32
    %c0_i32_1 = arith.constant 0 : i32
    return %c0_i32, %c0_i32_0 : i32, i32
  }
  func.func @transform_20(%arg0: i32) -> (i32, i32) {
    %c0_i32 = arith.constant 0 : i32
    %c0_i32_0 = arith.constant 0 : i32
    %c0_i32_1 = arith.constant 0 : i32
    return %c0_i32, %c0_i32_0 : i32, i32
  }
  func.func @transform_21(%arg0: i32) -> (i32, i32) {
    %c0_i32 = arith.constant 0 : i32
    %c0_i32_0 = arith.constant 0 : i32
    %c0_i32_1 = arith.constant 0 : i32
    return %c0_i32, %c0_i32_0 : i32, i32
  }
  func.func @transform_22(%arg0: i32) -> (i32, i32) {
    %c0_i32 = arith.constant 0 : i32
    %c0_i32_0 = arith.constant 0 : i32
    %c0_i32_1 = arith.constant 0 : i32
    return %c0_i32, %c0_i32_0 : i32, i32
  }
  func.func @transform_23(%arg0: i32) -> (i32, i32) {
    %c0_i32 = arith.constant 0 : i32
    %c0_i32_0 = arith.constant 0 : i32
    %c0_i32_1 = arith.constant 0 : i32
    return %c0_i32, %c0_i32_0 : i32, i32
  }
  func.func @transform_24(%arg0: i32) -> (i32, i32) {
    %c0_i32 = arith.constant 0 : i32
    %c0_i32_0 = arith.constant 0 : i32
    %c0_i32_1 = arith.constant 0 : i32
    return %c0_i32, %c0_i32_0 : i32, i32
  }
  func.func @transform_25(%arg0: i32) -> (i32, i32) {
    %c0_i32 = arith.constant 0 : i32
    %c0_i32_0 = arith.constant 0 : i32
    %c0_i32_1 = arith.constant 0 : i32
    return %c0_i32, %c0_i32_0 : i32, i32
  }
  func.func @transform_26(%arg0: i32) -> (i32, i32) {
    %c0_i32 = arith.constant 0 : i32
    %c0_i32_0 = arith.constant 0 : i32
    %c0_i32_1 = arith.constant 0 : i32
    return %c0_i32, %c0_i32_0 : i32, i32
  }
  func.func @transform_27(%arg0: i32) -> (i32, i32) {
    %c0_i32 = arith.constant 0 : i32
    %c0_i32_0 = arith.constant 0 : i32
    %c0_i32_1 = arith.constant 0 : i32
    return %c0_i32, %c0_i32_0 : i32, i32
  }
  func.func @transform_28(%arg0: i32) -> (i32, i32) {
    %c0_i32 = arith.constant 0 : i32
    %c0_i32_0 = arith.constant 0 : i32
    %c0_i32_1 = arith.constant 0 : i32
    return %c0_i32, %c0_i32_0 : i32, i32
  }
  func.func @transform_29(%arg0: i32) -> (i32, i32) {
    %c0_i32 = arith.constant 0 : i32
    %c0_i32_0 = arith.constant 0 : i32
    %c0_i32_1 = arith.constant 0 : i32
    return %c0_i32, %c0_i32_0 : i32, i32
  }
  func.func @transform_30(%arg0: i32) -> (i32, i32) {
    %c0_i32 = arith.constant 0 : i32
    %c0_i32_0 = arith.constant 0 : i32
    %c0_i32_1 = arith.constant 0 : i32
    return %c0_i32, %c0_i32_0 : i32, i32
  }
  func.func @transform_31(%arg0: i32) -> (i32, i32) {
    %c0_i32 = arith.constant 0 : i32
    %c0_i32_0 = arith.constant 0 : i32
    %c0_i32_1 = arith.constant 0 : i32
    return %c0_i32, %c0_i32_0 : i32, i32
  }
  func.func @transform_32(%arg0: i32) -> (i32, i32) {
    %c0_i32 = arith.constant 0 : i32
    %c0_i32_0 = arith.constant 0 : i32
    %c0_i32_1 = arith.constant 0 : i32
    return %c0_i32, %c0_i32_0 : i32, i32
  }
  func.func @transform_33(%arg0: i32) -> (i32, i32) {
    %c0_i32 = arith.constant 0 : i32
    %c0_i32_0 = arith.constant 0 : i32
    %c0_i32_1 = arith.constant 0 : i32
    return %c0_i32, %c0_i32_0 : i32, i32
  }
  func.func @transform_34(%arg0: i32) -> (i32, i32) {
    %c0_i32 = arith.constant 0 : i32
    %c0_i32_0 = arith.constant 0 : i32
    %c0_i32_1 = arith.constant 0 : i32
    return %c0_i32, %c0_i32_0 : i32, i32
  }
  func.func @transform_35(%arg0: i32) -> (i32, i32, i32) {
    %c0_i32 = arith.constant 0 : i32
    %c0_i32_0 = arith.constant 0 : i32
    %c0_i32_1 = arith.constant 0 : i32
    return %arg0, %c0_i32, %c0_i32_0 : i32, i32, i32
  }
  func.func @transform_36(%arg0: i32) -> (i32, i32, i32) {
    %c0_i32 = arith.constant 0 : i32
    %c0_i32_0 = arith.constant 0 : i32
    %c0_i32_1 = arith.constant 0 : i32
    return %arg0, %c0_i32, %c0_i32_0 : i32, i32, i32
  }
}

</mosaic_0001>

<llo_original>
// kernel: tpu_custom_call.1
$region0: #{tpu_custom_call.1}
  #allocation0 [shape = 'u32[]', space=smem, size = 0x4, offset = 0x4, fixed_abs, tag = 'smem constant byte address 0x4 - core index']
  #allocation1 [shape = 'u32[72,128]{1,0:T(1,128)}', space=vmem, size = 0x9000, scoped, tag = 'internal scratch']
  %s0 = inlined_call_operand.smem [shape: u32[37], index: -1, kind: input, shape index: {}]
  %s1 = sld [smem:[%s0]]
  %s2 = scalar_lea.smem %s0, 1
  %s3 = sld [smem:[%s2]]
  %s4 = scalar_lea.smem %s0, 2
  %s5 = sld [smem:[%s4]]
  %s6 = scalar_lea.smem %s0, 3
  %s7 = sld [smem:[%s6]]
  %s8 = scalar_lea.smem %s0, 4
  %s9 = sld [smem:[%s8]]
  %s10 = scalar_lea.smem %s0, 5
  %s11 = sld [smem:[%s10]]
  %s12 = scalar_lea.smem %s0, 6
  %s13 = sld [smem:[%s12]]
  %s14 = scalar_lea.smem %s0, 7
  %s15 = sld [smem:[%s14]]
  %s16 = scalar_lea.smem %s0, 8
  %s17 = sld [smem:[%s16]]
  %s18 = scalar_lea.smem %s0, 9
  %s19 = sld [smem:[%s18]]
  %s20 = scalar_lea.smem %s0, 10
  %s21 = sld [smem:[%s20]]
  %s22 = scalar_lea.smem %s0, 11
  %s23 = sld [smem:[%s22]]
  %s24 = scalar_lea.smem %s0, 12
  %s25 = sld [smem:[%s24]]
  %s26 = scalar_lea.smem %s0, 13
  %s27 = sld [smem:[%s26]]
  %s28 = scalar_lea.smem %s0, 14
  %s29 = sld [smem:[%s28]]
  %s30 = scalar_lea.smem %s0, 15
  %s31 = sld [smem:[%s30]]
  %s32 = scalar_lea.smem %s0, 16
  %s33 = sld [smem:[%s32]]
  %s34 = scalar_lea.smem %s0, 17
  %s35 = sld [smem:[%s34]]
  %s36 = scalar_lea.smem %s0, 18
  %s37 = sld [smem:[%s36]]
  %s38 = scalar_lea.smem %s0, 19
  %s39 = sld [smem:[%s38]]
  %s40 = scalar_lea.smem %s0, 20
  %s41 = sld [smem:[%s40]]
  %s42 = scalar_lea.smem %s0, 21
  %s43 = sld [smem:[%s42]]
  %s44 = scalar_lea.smem %s0, 22
  %s45 = sld [smem:[%s44]]
  %s46 = scalar_lea.smem %s0, 23
  %s47 = sld [smem:[%s46]]
  %s48 = scalar_lea.smem %s0, 24
  %s49 = sld [smem:[%s48]]
  %s50 = scalar_lea.smem %s0, 25
  %s51 = sld [smem:[%s50]]
  %s52 = scalar_lea.smem %s0, 26
  %s53 = sld [smem:[%s52]]
  %s54 = scalar_lea.smem %s0, 27
  %s55 = sld [smem:[%s54]]
  %s56 = scalar_lea.smem %s0, 28
  %s57 = sld [smem:[%s56]]
  %s58 = scalar_lea.smem %s0, 29
  %s59 = sld [smem:[%s58]]
  %s60 = scalar_lea.smem %s0, 30
  %s61 = sld [smem:[%s60]]
  %s62 = scalar_lea.smem %s0, 31
  %s63 = sld [smem:[%s62]]
  %s64 = scalar_lea.smem %s0, 32
  %s65 = sld [smem:[%s64]]
  %s66 = scalar_lea.smem %s0, 33
  %s67 = sld [smem:[%s66]]
  %s68 = scalar_lea.smem %s0, 34
  %s69 = sld [smem:[%s68]]
  %s70 = scalar_lea.smem %s0, 35
  %s71 = sld [smem:[%s70]]
  %s72 = scalar_lea.smem %s0, 36
  %s73 = sld [smem:[%s72]]
  %74 = xla_tuple %s71, %s73
  %s75 = sld [smem:[#allocation0]]
  $region205: #{tpu_custom_call.1} parent=0
    _
  %s77 = ssub.s32 1, %s75
  %s78 = scalar_select 0, %s77, %s75
  $region1: #{tpu_custom_call.1} parent=0
    #allocation2 [shape = 'u8[16384]{0}', space=vmem, size = 0x4000, scoped, tag = 'input window, operand 15, single buffered']
    #allocation3 [shape = 's32[2]{0}', space=sflag, size = 0x8, scoped, tag = 'scoped memory for tpu_custom_call.1']
    #allocation4 [shape = 's32[2]{0}', space=sflag, size = 0x8, scoped, tag = 'scoped memory for tpu_custom_call.1']
    #allocation5 [shape = 'u8[16384]{0}', space=vmem, size = 0x4000, scoped, tag = 'input window, operand 17, single buffered']
    #allocation6 [shape = 's32[1]{0}', space=sflag, size = 0x4, scoped, tag = 'scoped memory for tpu_custom_call.1']
    #allocation7 [shape = 'u8[16384]{0}', space=vmem, size = 0x4000, scoped, tag = 'input window, operand 21, single buffered']
    #allocation8 [shape = 'u8[16384]{0}', space=vmem, size = 0x4000, scoped, tag = 'input window, operand 23, single buffered']
    #allocation9 [shape = 's32[1]{0}', space=sflag, size = 0x4, scoped, tag = 'scoped memory for tpu_custom_call.1']
    #allocation10 [shape = 'u8[16384]{0}', space=vmem, size = 0x4000, scoped, tag = 'input window, operand 27, single buffered']
    #allocation11 [shape = 'u8[16384]{0}', space=vmem, size = 0x4000, scoped, tag = 'input window, operand 29, single buffered']
    #allocation12 [shape = 's32[1]{0}', space=sflag, size = 0x4, scoped, tag = 'scoped memory for tpu_custom_call.1']
    #allocation13 [shape = 'u8[4096]{0}', space=vmem, size = 0x1000, scoped, tag = 'output window, operand 1']
    %79 = vsyncpa [#allocation3], 0
    %80 = vsyncpa [#allocation6], 0
    %81 = vsyncpa [#allocation9], 0
    %82 = vsyncpa [#allocation12], 0
    %83 = vsyncpa [#allocation4], 0
    %s84 = scalar_lea.sflag [#allocation4], 1
    %85 = vsyncpa %s84, 0
    loop: start=0, step=1, limit=4
    $region2: #{tpu_custom_call.1} parent=1 // loop_pre_header
      _
    $region3: #{tpu_custom_call.1} parent=1 // loop_header
      %s87 = sphi 0, %s91
      %p88 = scmp.ge.s32.totalorder %s87, 4
      %s97 = sphi 0, %s99
      %s100 = sphi 0, %s97
      %s101 = sphi 0, %s100
      %s117 = sphi 0, %s101
      %s121 = sphi 0, %s121
      %s123 = sphi 0, %s121
      %s124 = sphi 0, %s123
      %s138 = sphi 0, %s124
      %s142 = sphi 0, %s142
      %s144 = sphi 0, %s142
      %s145 = sphi 0, %s144
      %s159 = sphi 0, %s145
      %s163 = sphi 0, %s163
      %s165 = sphi 0, %s163
      %s166 = sphi 0, %s165
      %s180 = sphi 0, %s166
      %s184 = sphi 0, %s184
      %s186 = sphi 0, %s184
      %s187 = sphi 0, %s186
      %s201 = sphi 0, %s187
      %s205 = sphi 0, %s205
      %s207 = sphi 0, %s205
      %s208 = sphi 0, %s207
      %s222 = sphi 0, %s208
      %s226 = sphi 0, %s226
      %s228 = sphi 0, %s226
      %s229 = sphi 0, %s228
      %s243 = sphi 0, %s229
      %s247 = sphi 0, %s247
      %s249 = sphi 0, %s247
      %s250 = sphi 0, %s249
      %s264 = sphi 0, %s250
      %s268 = sphi 0, %s268
      %s270 = sphi 0, %s268
      %s271 = sphi 0, %s270
      %s285 = sphi 0, %s271
      %s289 = sphi 0, %s289
      %s291 = sphi 0, %s289
      %s292 = sphi 0, %s291
      %s306 = sphi 0, %s292
      %s310 = sphi 0, %s310
      %s312 = sphi 0, %s310
      %s313 = sphi 0, %s312
      %s327 = sphi 0, %s313
      %s331 = sphi 0, %s331
      %s333 = sphi 0, %s331
      %s334 = sphi 0, %s333
      %s348 = sphi 0, %s334
      %s352 = sphi 0, %s352
      %s354 = sphi 0, %s352
      %s355 = sphi 0, %s354
      %s369 = sphi 0, %s355
      %s373 = sphi 0, %s373
      %s375 = sphi 0, %s373
      %s376 = sphi 0, %s375
      %s390 = sphi 0, %s376
      %s394 = sphi 0, %s394
      %s396 = sphi 0, %s394
      %s397 = sphi 0, %s396
      %s411 = sphi 0, %s397
      %s415 = sphi 0, %s415
      %s417 = sphi 0, %s415
      %s418 = sphi 0, %s417
      %s432 = sphi 0, %s418
      %s436 = sphi 0, %s436
      %s438 = sphi 0, %s436
      %s439 = sphi 0, %s438
      %s453 = sphi 0, %s439
      %s457 = sphi 0, %s457
      %s459 = sphi 0, %s457
      %s460 = sphi 0, %s459
      %s474 = sphi 0, %s460
      %s478 = sphi 0, %s478
      %s480 = sphi 0, %s478
      %s481 = sphi 0, %s480
      %s495 = sphi 0, %s481
      %s499 = sphi 0, %s499
      %s501 = sphi 0, %s499
      %s502 = sphi 0, %s501
      %s516 = sphi 0, %s502
      %s520 = sphi 0, %s520
      %s522 = sphi 0, %s520
      %s523 = sphi 0, %s522
      %s537 = sphi 0, %s523
      %s541 = sphi 0, %s541
      %s543 = sphi 0, %s541
      %s544 = sphi 0, %s543
      %s558 = sphi 0, %s544
      %s562 = sphi 0, %s562
      %s564 = sphi 0, %s562
      %s565 = sphi 0, %s564
      %s579 = sphi 0, %s565
      %s583 = sphi 0, %s583
      %s585 = sphi 0, %s583
      %s586 = sphi 0, %s585
      %s600 = sphi 0, %s586
      %s604 = sphi 0, %s604
      %s606 = sphi 0, %s604
      %s607 = sphi 0, %s606
      %s621 = sphi 0, %s607
      %s625 = sphi 0, %s625
      %s627 = sphi 0, %s625
      %s628 = sphi 0, %s627
      %s642 = sphi 0, %s628
      %s646 = sphi 0, %s646
      %s648 = sphi 0, %s646
      %s649 = sphi 0, %s648
      %s663 = sphi 0, %s649
      %s667 = sphi 0, %s667
      %s669 = sphi 0, %s667
      %s670 = sphi 0, %s669
      %s684 = sphi 0, %s670
      %s688 = sphi 0, %s688
      %s690 = sphi 0, %s688
      %s691 = sphi 0, %s690
      %s705 = sphi 0, %s691
      %s709 = sphi 0, %s709
      %s711 = sphi 0, %s709
      %s712 = sphi 0, %s711
      %s726 = sphi 0, %s712
      %s730 = sphi 0, %s730
      %s732 = sphi 0, %s730
      %s733 = sphi 0, %s732
      %s747 = sphi 0, %s733
      %s751 = sphi 0, %s751
      %s753 = sphi 0, %s751
      %s754 = sphi 0, %s753
      %s768 = sphi 0, %s754
      %s772 = sphi 0, %s772
      %s774 = sphi 0, %s772
      %s775 = sphi 0, %s774
      %s789 = sphi 0, %s775
      %s793 = sphi 0, %s793
      %s795 = sphi 0, %s793
      %s796 = sphi 0, %s795
      %s810 = sphi 0, %s796
      %s814 = sphi 0, %s814
      %s816 = sphi 0, %s814
      %s817 = sphi 0, %s816
      %s831 = sphi 0, %s817
      %s837 = sphi 0, %s839
      %s840 = sphi 0, %s837
      %s841 = sphi 0, %s840
      %s857 = sphi 0, %s841
      %s863 = sphi 0, %s865
      %s866 = sphi 0, %s863
      %s867 = sphi 0, %s866
      %s883 = sphi 0, %s867
    $region4: #{tpu_custom_call.1} parent=1 // loop_header_branch
      %90 = sbr.rel (%p88) target = $region8
    $region5: #{tpu_custom_call.1} parent=1 // loop_body
      %s92 = ssub.s32 %s87, 1
      %s93 = ssub.s32 %s87, 2
      %s94 = sadd.s32 %s87, 1
      %s95 = ssub.s32 %s87, %s94
      %p96 = scmp.eq.s32.totalorder %s95, 0
      %s98 = sadd.s32 %s97, 1
      %s99 = scalar_select %p96, %s97, %s98
      %p102 = pneg %p96
      %p103 = scmp.eq.s32.totalorder %s87, 1
      %p104 = por %p102, %p103
      %p105 = scmp.ne.s32.totalorder %s97, %s100
      %p106 = scmp.eq.s32.totalorder %s87, 0
      %p107 = por %p105, %p106
      %p108 = scmp.ne.s32.totalorder %s97, %s100
      %p109 = scmp.eq.s32.totalorder %s92, 1
      %p110 = por %p108, %p109
      %p111 = scmp.ne.s32.totalorder %s100, %s101
      %p112 = scmp.eq.s32.totalorder %s92, 0
      %p113 = por %p111, %p112
      %p114 = scmp.ne.s32.totalorder %s100, %s101
      %p115 = scmp.eq.s32.totalorder %s93, 1
      %p116 = por %p114, %p115
      %p118 = scmp.ne.s32.totalorder %s101, %s117
      %p119 = scmp.eq.s32.totalorder %s93, 0
      %p120 = por %p118, %p119
      %s122 = sadd.s32 %s121, 1
      %p125 = scmp.eq.s32.totalorder %s87, 1
      %p126 = scmp.ne.s32.totalorder %s121, %s123
      %p127 = scmp.eq.s32.totalorder %s87, 0
      %p128 = por %p126, %p127
      %p129 = scmp.ne.s32.totalorder %s121, %s123
      %p130 = scmp.eq.s32.totalorder %s92, 1
      %p131 = por %p129, %p130
      %p132 = scmp.ne.s32.totalorder %s123, %s124
      %p133 = scmp.eq.s32.totalorder %s92, 0
      %p134 = por %p132, %p133
      %p135 = scmp.ne.s32.totalorder %s123, %s124
      %p136 = scmp.eq.s32.totalorder %s93, 1
      %p137 = por %p135, %p136
      %p139 = scmp.ne.s32.totalorder %s124, %s138
      %p140 = scmp.eq.s32.totalorder %s93, 0
      %p141 = por %p139, %p140
      %s143 = sadd.s32 %s142, 1
      %p146 = scmp.eq.s32.totalorder %s87, 1
      %p147 = scmp.ne.s32.totalorder %s142, %s144
      %p148 = scmp.eq.s32.totalorder %s87, 0
      %p149 = por %p147, %p148
      %p150 = scmp.ne.s32.totalorder %s142, %s144
      %p151 = scmp.eq.s32.totalorder %s92, 1
      %p152 = por %p150, %p151
      %p153 = scmp.ne.s32.totalorder %s144, %s145
      %p154 = scmp.eq.s32.totalorder %s92, 0
      %p155 = por %p153, %p154
      %p156 = scmp.ne.s32.totalorder %s144, %s145
      %p157 = scmp.eq.s32.totalorder %s93, 1
      %p158 = por %p156, %p157
      %p160 = scmp.ne.s32.totalorder %s145, %s159
      %p161 = scmp.eq.s32.totalorder %s93, 0
      %p162 = por %p160, %p161
      %s164 = sadd.s32 %s163, 1
      %p167 = scmp.eq.s32.totalorder %s87, 1
      %p168 = scmp.ne.s32.totalorder %s163, %s165
      %p169 = scmp.eq.s32.totalorder %s87, 0
      %p170 = por %p168, %p169
      %p171 = scmp.ne.s32.totalorder %s163, %s165
      %p172 = scmp.eq.s32.totalorder %s92, 1
      %p173 = por %p171, %p172
      %p174 = scmp.ne.s32.totalorder %s165, %s166
      %p175 = scmp.eq.s32.totalorder %s92, 0
      %p176 = por %p174, %p175
      %p177 = scmp.ne.s32.totalorder %s165, %s166
      %p178 = scmp.eq.s32.totalorder %s93, 1
      %p179 = por %p177, %p178
      %p181 = scmp.ne.s32.totalorder %s166, %s180
      %p182 = scmp.eq.s32.totalorder %s93, 0
      %p183 = por %p181, %p182
      %s185 = sadd.s32 %s184, 1
      %p188 = scmp.eq.s32.totalorder %s87, 1
      %p189 = scmp.ne.s32.totalorder %s184, %s186
      %p190 = scmp.eq.s32.totalorder %s87, 0
      %p191 = por %p189, %p190
      %p192 = scmp.ne.s32.totalorder %s184, %s186
      %p193 = scmp.eq.s32.totalorder %s92, 1
      %p194 = por %p192, %p193
      %p195 = scmp.ne.s32.totalorder %s186, %s187
      %p196 = scmp.eq.s32.totalorder %s92, 0
      %p197 = por %p195, %p196
      %p198 = scmp.ne.s32.totalorder %s186, %s187
      %p199 = scmp.eq.s32.totalorder %s93, 1
      %p200 = por %p198, %p199
      %p202 = scmp.ne.s32.totalorder %s187, %s201
      %p203 = scmp.eq.s32.totalorder %s93, 0
      %p204 = por %p202, %p203
      %s206 = sadd.s32 %s205, 1
      %p209 = scmp.eq.s32.totalorder %s87, 1
      %p210 = scmp.ne.s32.totalorder %s205, %s207
      %p211 = scmp.eq.s32.totalorder %s87, 0
      %p212 = por %p210, %p211
      %p213 = scmp.ne.s32.totalorder %s205, %s207
      %p214 = scmp.eq.s32.totalorder %s92, 1
      %p215 = por %p213, %p214
      %p216 = scmp.ne.s32.totalorder %s207, %s208
      %p217 = scmp.eq.s32.totalorder %s92, 0
      %p218 = por %p216, %p217
      %p219 = scmp.ne.s32.totalorder %s207, %s208
      %p220 = scmp.eq.s32.totalorder %s93, 1
      %p221 = por %p219, %p220
      %p223 = scmp.ne.s32.totalorder %s208, %s222
      %p224 = scmp.eq.s32.totalorder %s93, 0
      %p225 = por %p223, %p224
      %s227 = sadd.s32 %s226, 1
      %p230 = scmp.eq.s32.totalorder %s87, 1
      %p231 = scmp.ne.s32.totalorder %s226, %s228
      %p232 = scmp.eq.s32.totalorder %s87, 0
      %p233 = por %p231, %p232
      %p234 = scmp.ne.s32.totalorder %s226, %s228
      %p235 = scmp.eq.s32.totalorder %s92, 1
      %p236 = por %p234, %p235
      %p237 = scmp.ne.s32.totalorder %s228, %s229
      %p238 = scmp.eq.s32.totalorder %s92, 0
      %p239 = por %p237, %p238
      %p240 = scmp.ne.s32.totalorder %s228, %s229
      %p241 = scmp.eq.s32.totalorder %s93, 1
      %p242 = por %p240, %p241
      %p244 = scmp.ne.s32.totalorder %s229, %s243
      %p245 = scmp.eq.s32.totalorder %s93, 0
      %p246 = por %p244, %p245
      %s248 = sadd.s32 %s247, 1
      %p251 = scmp.eq.s32.totalorder %s87, 1
      %p252 = scmp.ne.s32.totalorder %s247, %s249
      %p253 = scmp.eq.s32.totalorder %s87, 0
      %p254 = por %p252, %p253
      %p255 = scmp.ne.s32.totalorder %s247, %s249
      %p256 = scmp.eq.s32.totalorder %s92, 1
      %p257 = por %p255, %p256
      %p258 = scmp.ne.s32.totalorder %s249, %s250
      %p259 = scmp.eq.s32.totalorder %s92, 0
      %p260 = por %p258, %p259
      %p261 = scmp.ne.s32.totalorder %s249, %s250
      %p262 = scmp.eq.s32.totalorder %s93, 1
      %p263 = por %p261, %p262
      %p265 = scmp.ne.s32.totalorder %s250, %s264
      %p266 = scmp.eq.s32.totalorder %s93, 0
      %p267 = por %p265, %p266
      %s269 = sadd.s32 %s268, 1
      %p272 = scmp.eq.s32.totalorder %s87, 1
      %p273 = scmp.ne.s32.totalorder %s268, %s270
      %p274 = scmp.eq.s32.totalorder %s87, 0
      %p275 = por %p273, %p274
      %p276 = scmp.ne.s32.totalorder %s268, %s270
      %p277 = scmp.eq.s32.totalorder %s92, 1
      %p278 = por %p276, %p277
      %p279 = scmp.ne.s32.totalorder %s270, %s271
      %p280 = scmp.eq.s32.totalorder %s92, 0
      %p281 = por %p279, %p280
      %p282 = scmp.ne.s32.totalorder %s270, %s271
      %p283 = scmp.eq.s32.totalorder %s93, 1
      %p284 = por %p282, %p283
      %p286 = scmp.ne.s32.totalorder %s271, %s285
      %p287 = scmp.eq.s32.totalorder %s93, 0
      %p288 = por %p286, %p287
      %s290 = sadd.s32 %s289, 1
      %p293 = scmp.eq.s32.totalorder %s87, 1
      %p294 = scmp.ne.s32.totalorder %s289, %s291
      %p295 = scmp.eq.s32.totalorder %s87, 0
      %p296 = por %p294, %p295
      %p297 = scmp.ne.s32.totalorder %s289, %s291
      %p298 = scmp.eq.s32.totalorder %s92, 1
      %p299 = por %p297, %p298
      %p300 = scmp.ne.s32.totalorder %s291, %s292
      %p301 = scmp.eq.s32.totalorder %s92, 0
      %p302 = por %p300, %p301
      %p303 = scmp.ne.s32.totalorder %s291, %s292
      %p304 = scmp.eq.s32.totalorder %s93, 1
      %p305 = por %p303, %p304
      %p307 = scmp.ne.s32.totalorder %s292, %s306
      %p308 = scmp.eq.s32.totalorder %s93, 0
      %p309 = por %p307, %p308
      %s311 = sadd.s32 %s310, 1
      %p314 = scmp.eq.s32.totalorder %s87, 1
      %p315 = scmp.ne.s32.totalorder %s310, %s312
      %p316 = scmp.eq.s32.totalorder %s87, 0
      %p317 = por %p315, %p316
      %p318 = scmp.ne.s32.totalorder %s310, %s312
      %p319 = scmp.eq.s32.totalorder %s92, 1
      %p320 = por %p318, %p319
      %p321 = scmp.ne.s32.totalorder %s312, %s313
      %p322 = scmp.eq.s32.totalorder %s92, 0
      %p323 = por %p321, %p322
      %p324 = scmp.ne.s32.totalorder %s312, %s313
      %p325 = scmp.eq.s32.totalorder %s93, 1
      %p326 = por %p324, %p325
      %p328 = scmp.ne.s32.totalorder %s313, %s327
      %p329 = scmp.eq.s32.totalorder %s93, 0
      %p330 = por %p328, %p329
      %s332 = sadd.s32 %s331, 1
      %p335 = scmp.eq.s32.totalorder %s87, 1
      %p336 = scmp.ne.s32.totalorder %s331, %s333
      %p337 = scmp.eq.s32.totalorder %s87, 0
      %p338 = por %p336, %p337
      %p339 = scmp.ne.s32.totalorder %s331, %s333
      %p340 = scmp.eq.s32.totalorder %s92, 1
      %p341 = por %p339, %p340
      %p342 = scmp.ne.s32.totalorder %s333, %s334
      %p343 = scmp.eq.s32.totalorder %s92, 0
      %p344 = por %p342, %p343
      %p345 = scmp.ne.s32.totalorder %s333, %s334
      %p346 = scmp.eq.s32.totalorder %s93, 1
      %p347 = por %p345, %p346
      %p349 = scmp.ne.s32.totalorder %s334, %s348
      %p350 = scmp.eq.s32.totalorder %s93, 0
      %p351 = por %p349, %p350
      %s353 = sadd.s32 %s352, 1
      %p356 = scmp.eq.s32.totalorder %s87, 1
      %p357 = scmp.ne.s32.totalorder %s352, %s354
      %p358 = scmp.eq.s32.totalorder %s87, 0
      %p359 = por %p357, %p358
      %p360 = scmp.ne.s32.totalorder %s352, %s354
      %p361 = scmp.eq.s32.totalorder %s92, 1
      %p362 = por %p360, %p361
      %p363 = scmp.ne.s32.totalorder %s354, %s355
      %p364 = scmp.eq.s32.totalorder %s92, 0
      %p365 = por %p363, %p364
      %p366 = scmp.ne.s32.totalorder %s354, %s355
      %p367 = scmp.eq.s32.totalorder %s93, 1
      %p368 = por %p366, %p367
      %p370 = scmp.ne.s32.totalorder %s355, %s369
      %p371 = scmp.eq.s32.totalorder %s93, 0
      %p372 = por %p370, %p371
      %s374 = sadd.s32 %s373, 1
      %p377 = scmp.eq.s32.totalorder %s87, 1
      %p378 = scmp.ne.s32.totalorder %s373, %s375
      %p379 = scmp.eq.s32.totalorder %s87, 0
      %p380 = por %p378, %p379
      %p381 = scmp.ne.s32.totalorder %s373, %s375
      %p382 = scmp.eq.s32.totalorder %s92, 1
      %p383 = por %p381, %p382
      %p384 = scmp.ne.s32.totalorder %s375, %s376
      %p385 = scmp.eq.s32.totalorder %s92, 0
      %p386 = por %p384, %p385
      %p387 = scmp.ne.s32.totalorder %s375, %s376
      %p388 = scmp.eq.s32.totalorder %s93, 1
      %p389 = por %p387, %p388
      %p391 = scmp.ne.s32.totalorder %s376, %s390
      %p392 = scmp.eq.s32.totalorder %s93, 0
      %p393 = por %p391, %p392
      %s395 = sadd.s32 %s394, 1
      %p398 = scmp.eq.s32.totalorder %s87, 1
      %p399 = scmp.ne.s32.totalorder %s394, %s396
      %p400 = scmp.eq.s32.totalorder %s87, 0
      %p401 = por %p399, %p400
      %p402 = scmp.ne.s32.totalorder %s394, %s396
      %p403 = scmp.eq.s32.totalorder %s92, 1
      %p404 = por %p402, %p403
      %p405 = scmp.ne.s32.totalorder %s396, %s397
      %p406 = scmp.eq.s32.totalorder %s92, 0
      %p407 = por %p405, %p406
      %p408 = scmp.ne.s32.totalorder %s396, %s397
      %p409 = scmp.eq.s32.totalorder %s93, 1
      %p410 = por %p408, %p409
      %p412 = scmp.ne.s32.totalorder %s397, %s411
      %p413 = scmp.eq.s32.totalorder %s93, 0
      %p414 = por %p412, %p413
      %s416 = sadd.s32 %s415, 1
      %p419 = scmp.eq.s32.totalorder %s87, 1
      %p420 = scmp.ne.s32.totalorder %s415, %s417
      %p421 = scmp.eq.s32.totalorder %s87, 0
      %p422 = por %p420, %p421
      %p423 = scmp.ne.s32.totalorder %s415, %s417
      %p424 = scmp.eq.s32.totalorder %s92, 1
      %p425 = por %p423, %p424
      %p426 = scmp.ne.s32.totalorder %s417, %s418
      %p427 = scmp.eq.s32.totalorder %s92, 0
      %p428 = por %p426, %p427
      %p429 = scmp.ne.s32.totalorder %s417, %s418
      %p430 = scmp.eq.s32.totalorder %s93, 1
      %p431 = por %p429, %p430
      %p433 = scmp.ne.s32.totalorder %s418, %s432
      %p434 = scmp.eq.s32.totalorder %s93, 0
      %p435 = por %p433, %p434
      %s437 = sadd.s32 %s436, 1
      %p440 = scmp.eq.s32.totalorder %s87, 1
      %p441 = scmp.ne.s32.totalorder %s436, %s438
      %p442 = scmp.eq.s32.totalorder %s87, 0
      %p443 = por %p441, %p442
      %p444 = scmp.ne.s32.totalorder %s436, %s438
      %p445 = scmp.eq.s32.totalorder %s92, 1
      %p446 = por %p444, %p445
      %p447 = scmp.ne.s32.totalorder %s438, %s439
      %p448 = scmp.eq.s32.totalorder %s92, 0
      %p449 = por %p447, %p448
      %p450 = scmp.ne.s32.totalorder %s438, %s439
      %p451 = scmp.eq.s32.totalorder %s93, 1
      %p452 = por %p450, %p451
      %p454 = scmp.ne.s32.totalorder %s439, %s453
      %p455 = scmp.eq.s32.totalorder %s93, 0
      %p456 = por %p454, %p455
      %s458 = sadd.s32 %s457, 1
      %p461 = scmp.eq.s32.totalorder %s87, 1
      %p462 = scmp.ne.s32.totalorder %s457, %s459
      %p463 = scmp.eq.s32.totalorder %s87, 0
      %p464 = por %p462, %p463
      %p465 = scmp.ne.s32.totalorder %s457, %s459
      %p466 = scmp.eq.s32.totalorder %s92, 1
      %p467 = por %p465, %p466
      %p468 = scmp.ne.s32.totalorder %s459, %s460
      %p469 = scmp.eq.s32.totalorder %s92, 0
      %p470 = por %p468, %p469
      %p471 = scmp.ne.s32.totalorder %s459, %s460
      %p472 = scmp.eq.s32.totalorder %s93, 1
      %p473 = por %p471, %p472
      %p475 = scmp.ne.s32.totalorder %s460, %s474
      %p476 = scmp.eq.s32.totalorder %s93, 0
      %p477 = por %p475, %p476
      %s479 = sadd.s32 %s478, 1
      %p482 = scmp.eq.s32.totalorder %s87, 1
      %p483 = scmp.ne.s32.totalorder %s478, %s480
      %p484 = scmp.eq.s32.totalorder %s87, 0
      %p485 = por %p483, %p484
      %p486 = scmp.ne.s32.totalorder %s478, %s480
      %p487 = scmp.eq.s32.totalorder %s92, 1
      %p488 = por %p486, %p487
      %p489 = scmp.ne.s32.totalorder %s480, %s481
      %p490 = scmp.eq.s32.totalorder %s92, 0
      %p491 = por %p489, %p490
      %p492 = scmp.ne.s32.totalorder %s480, %s481
      %p493 = scmp.eq.s32.totalorder %s93, 1
      %p494 = por %p492, %p493
      %p496 = scmp.ne.s32.totalorder %s481, %s495
      %p497 = scmp.eq.s32.totalorder %s93, 0
      %p498 = por %p496, %p497
      %s500 = sadd.s32 %s499, 1
      %p503 = scmp.eq.s32.totalorder %s87, 1
      %p504 = scmp.ne.s32.totalorder %s499, %s501
      %p505 = scmp.eq.s32.totalorder %s87, 0
      %p506 = por %p504, %p505
      %p507 = scmp.ne.s32.totalorder %s499, %s501
      %p508 = scmp.eq.s32.totalorder %s92, 1
      %p509 = por %p507, %p508
      %p510 = scmp.ne.s32.totalorder %s501, %s502
      %p511 = scmp.eq.s32.totalorder %s92, 0
      %p512 = por %p510, %p511
      %p513 = scmp.ne.s32.totalorder %s501, %s502
      %p514 = scmp.eq.s32.totalorder %s93, 1
      %p515 = por %p513, %p514
      %p517 = scmp.ne.s32.totalorder %s502, %s516
      %p518 = scmp.eq.s32.totalorder %s93, 0
      %p519 = por %p517, %p518
      %s521 = sadd.s32 %s520, 1
      %p524 = scmp.eq.s32.totalorder %s87, 1
      %p525 = scmp.ne.s32.totalorder %s520, %s522
      %p526 = scmp.eq.s32.totalorder %s87, 0
      %p527 = por %p525, %p526
      %p528 = scmp.ne.s32.totalorder %s520, %s522
      %p529 = scmp.eq.s32.totalorder %s92, 1
      %p530 = por %p528, %p529
      %p531 = scmp.ne.s32.totalorder %s522, %s523
      %p532 = scmp.eq.s32.totalorder %s92, 0
      %p533 = por %p531, %p532
      %p534 = scmp.ne.s32.totalorder %s522, %s523
      %p535 = scmp.eq.s32.totalorder %s93, 1
      %p536 = por %p534, %p535
      %p538 = scmp.ne.s32.totalorder %s523, %s537
      %p539 = scmp.eq.s32.totalorder %s93, 0
      %p540 = por %p538, %p539
      %s542 = sadd.s32 %s541, 1
      %p545 = scmp.eq.s32.totalorder %s87, 1
      %p546 = scmp.ne.s32.totalorder %s541, %s543
      %p547 = scmp.eq.s32.totalorder %s87, 0
      %p548 = por %p546, %p547
      %p549 = scmp.ne.s32.totalorder %s541, %s543
      %p550 = scmp.eq.s32.totalorder %s92, 1
      %p551 = por %p549, %p550
      %p552 = scmp.ne.s32.totalorder %s543, %s544
      %p553 = scmp.eq.s32.totalorder %s92, 0
      %p554 = por %p552, %p553
      %p555 = scmp.ne.s32.totalorder %s543, %s544
      %p556 = scmp.eq.s32.totalorder %s93, 1
      %p557 = por %p555, %p556
      %p559 = scmp.ne.s32.totalorder %s544, %s558
      %p560 = scmp.eq.s32.totalorder %s93, 0
      %p561 = por %p559, %p560
      %s563 = sadd.s32 %s562, 1
      %p566 = scmp.eq.s32.totalorder %s87, 1
      %p567 = scmp.ne.s32.totalorder %s562, %s564
      %p568 = scmp.eq.s32.totalorder %s87, 0
      %p569 = por %p567, %p568
      %p570 = scmp.ne.s32.totalorder %s562, %s564
      %p571 = scmp.eq.s32.totalorder %s92, 1
      %p572 = por %p570, %p571
      %p573 = scmp.ne.s32.totalorder %s564, %s565
      %p574 = scmp.eq.s32.totalorder %s92, 0
      %p575 = por %p573, %p574
      %p576 = scmp.ne.s32.totalorder %s564, %s565
      %p577 = scmp.eq.s32.totalorder %s93, 1
      %p578 = por %p576, %p577
      %p580 = scmp.ne.s32.totalorder %s565, %s579
      %p581 = scmp.eq.s32.totalorder %s93, 0
      %p582 = por %p580, %p581
      %s584 = sadd.s32 %s583, 1
      %p587 = scmp.eq.s32.totalorder %s87, 1
      %p588 = scmp.ne.s32.totalorder %s583, %s585
      %p589 = scmp.eq.s32.totalorder %s87, 0
      %p590 = por %p588, %p589
      %p591 = scmp.ne.s32.totalorder %s583, %s585
      %p592 = scmp.eq.s32.totalorder %s92, 1
      %p593 = por %p591, %p592
      %p594 = scmp.ne.s32.totalorder %s585, %s586
      %p595 = scmp.eq.s32.totalorder %s92, 0
      %p596 = por %p594, %p595
      %p597 = scmp.ne.s32.totalorder %s585, %s586
      %p598 = scmp.eq.s32.totalorder %s93, 1
      %p599 = por %p597, %p598
      %p601 = scmp.ne.s32.totalorder %s586, %s600
      %p602 = scmp.eq.s32.totalorder %s93, 0
      %p603 = por %p601, %p602
      %s605 = sadd.s32 %s604, 1
      %p608 = scmp.eq.s32.totalorder %s87, 1
      %p609 = scmp.ne.s32.totalorder %s604, %s606
      %p610 = scmp.eq.s32.totalorder %s87, 0
      %p611 = por %p609, %p610
      %p612 = scmp.ne.s32.totalorder %s604, %s606
      %p613 = scmp.eq.s32.totalorder %s92, 1
      %p614 = por %p612, %p613
      %p615 = scmp.ne.s32.totalorder %s606, %s607
      %p616 = scmp.eq.s32.totalorder %s92, 0
      %p617 = por %p615, %p616
      %p618 = scmp.ne.s32.totalorder %s606, %s607
      %p619 = scmp.eq.s32.totalorder %s93, 1
      %p620 = por %p618, %p619
      %p622 = scmp.ne.s32.totalorder %s607, %s621
      %p623 = scmp.eq.s32.totalorder %s93, 0
      %p624 = por %p622, %p623
      %s626 = sadd.s32 %s625, 1
      %p629 = scmp.eq.s32.totalorder %s87, 1
      %p630 = scmp.ne.s32.totalorder %s625, %s627
      %p631 = scmp.eq.s32.totalorder %s87, 0
      %p632 = por %p630, %p631
      %p633 = scmp.ne.s32.totalorder %s625, %s627
      %p634 = scmp.eq.s32.totalorder %s92, 1
      %p635 = por %p633, %p634
      %p636 = scmp.ne.s32.totalorder %s627, %s628
      %p637 = scmp.eq.s32.totalorder %s92, 0
      %p638 = por %p636, %p637
      %p639 = scmp.ne.s32.totalorder %s627, %s628
      %p640 = scmp.eq.s32.totalorder %s93, 1
      %p641 = por %p639, %p640
      %p643 = scmp.ne.s32.totalorder %s628, %s642
      %p644 = scmp.eq.s32.totalorder %s93, 0
      %p645 = por %p643, %p644
      %s647 = sadd.s32 %s646, 1
      %p650 = scmp.eq.s32.totalorder %s87, 1
      %p651 = scmp.ne.s32.totalorder %s646, %s648
      %p652 = scmp.eq.s32.totalorder %s87, 0
      %p653 = por %p651, %p652
      %p654 = scmp.ne.s32.totalorder %s646, %s648
      %p655 = scmp.eq.s32.totalorder %s92, 1
      %p656 = por %p654, %p655
      %p657 = scmp.ne.s32.totalorder %s648, %s649
      %p658 = scmp.eq.s32.totalorder %s92, 0
      %p659 = por %p657, %p658
      %p660 = scmp.ne.s32.totalorder %s648, %s649
      %p661 = scmp.eq.s32.totalorder %s93, 1
      %p662 = por %p660, %p661
      %p664 = scmp.ne.s32.totalorder %s649, %s663
      %p665 = scmp.eq.s32.totalorder %s93, 0
      %p666 = por %p664, %p665
      %s668 = sadd.s32 %s667, 1
      %p671 = scmp.eq.s32.totalorder %s87, 1
      %p672 = scmp.ne.s32.totalorder %s667, %s669
      %p673 = scmp.eq.s32.totalorder %s87, 0
      %p674 = por %p672, %p673
      %p675 = scmp.ne.s32.totalorder %s667, %s669
      %p676 = scmp.eq.s32.totalorder %s92, 1
      %p677 = por %p675, %p676
      %p678 = scmp.ne.s32.totalorder %s669, %s670
      %p679 = scmp.eq.s32.totalorder %s92, 0
      %p680 = por %p678, %p679
      %p681 = scmp.ne.s32.totalorder %s669, %s670
      %p682 = scmp.eq.s32.totalorder %s93, 1
      %p683 = por %p681, %p682
      %p685 = scmp.ne.s32.totalorder %s670, %s684
      %p686 = scmp.eq.s32.totalorder %s93, 0
      %p687 = por %p685, %p686
      %s689 = sadd.s32 %s688, 1
      %p692 = scmp.eq.s32.totalorder %s87, 1
      %p693 = scmp.ne.s32.totalorder %s688, %s690
      %p694 = scmp.eq.s32.totalorder %s87, 0
      %p695 = por %p693, %p694
      %p696 = scmp.ne.s32.totalorder %s688, %s690
      %p697 = scmp.eq.s32.totalorder %s92, 1
      %p698 = por %p696, %p697
      %p699 = scmp.ne.s32.totalorder %s690, %s691
      %p700 = scmp.eq.s32.totalorder %s92, 0
      %p701 = por %p699, %p700
      %p702 = scmp.ne.s32.totalorder %s690, %s691
      %p703 = scmp.eq.s32.totalorder %s93, 1
      %p704 = por %p702, %p703
      %p706 = scmp.ne.s32.totalorder %s691, %s705
      %p707 = scmp.eq.s32.totalorder %s93, 0
      %p708 = por %p706, %p707
      %s710 = sadd.s32 %s709, 1
      %p713 = scmp.eq.s32.totalorder %s87, 1
      %p714 = scmp.ne.s32.totalorder %s709, %s711
      %p715 = scmp.eq.s32.totalorder %s87, 0
      %p716 = por %p714, %p715
      %p717 = scmp.ne.s32.totalorder %s709, %s711
      %p718 = scmp.eq.s32.totalorder %s92, 1
      %p719 = por %p717, %p718
      %p720 = scmp.ne.s32.totalorder %s711, %s712
      %p721 = scmp.eq.s32.totalorder %s92, 0
      %p722 = por %p720, %p721
      %p723 = scmp.ne.s32.totalorder %s711, %s712
      %p724 = scmp.eq.s32.totalorder %s93, 1
      %p725 = por %p723, %p724
      %p727 = scmp.ne.s32.totalorder %s712, %s726
      %p728 = scmp.eq.s32.totalorder %s93, 0
      %p729 = por %p727, %p728
      %s731 = sadd.s32 %s730, 1
      %p734 = scmp.eq.s32.totalorder %s87, 1
      %p735 = scmp.ne.s32.totalorder %s730, %s732
      %p736 = scmp.eq.s32.totalorder %s87, 0
      %p737 = por %p735, %p736
      %p738 = scmp.ne.s32.totalorder %s730, %s732
      %p739 = scmp.eq.s32.totalorder %s92, 1
      %p740 = por %p738, %p739
      %p741 = scmp.ne.s32.totalorder %s732, %s733
      %p742 = scmp.eq.s32.totalorder %s92, 0
      %p743 = por %p741, %p742
      %p744 = scmp.ne.s32.totalorder %s732, %s733
      %p745 = scmp.eq.s32.totalorder %s93, 1
      %p746 = por %p744, %p745
      %p748 = scmp.ne.s32.totalorder %s733, %s747
      %p749 = scmp.eq.s32.totalorder %s93, 0
      %p750 = por %p748, %p749
      %s752 = sadd.s32 %s751, 1
      %p755 = scmp.eq.s32.totalorder %s87, 1
      %p756 = scmp.ne.s32.totalorder %s751, %s753
      %p757 = scmp.eq.s32.totalorder %s87, 0
      %p758 = por %p756, %p757
      %p759 = scmp.ne.s32.totalorder %s751, %s753
      %p760 = scmp.eq.s32.totalorder %s92, 1
      %p761 = por %p759, %p760
      %p762 = scmp.ne.s32.totalorder %s753, %s754
      %p763 = scmp.eq.s32.totalorder %s92, 0
      %p764 = por %p762, %p763
      %p765 = scmp.ne.s32.totalorder %s753, %s754
      %p766 = scmp.eq.s32.totalorder %s93, 1
      %p767 = por %p765, %p766
      %p769 = scmp.ne.s32.totalorder %s754, %s768
      %p770 = scmp.eq.s32.totalorder %s93, 0
      %p771 = por %p769, %p770
      %s773 = sadd.s32 %s772, 1
      %p776 = scmp.eq.s32.totalorder %s87, 1
      %p777 = scmp.ne.s32.totalorder %s772, %s774
      %p778 = scmp.eq.s32.totalorder %s87, 0
      %p779 = por %p777, %p778
      %p780 = scmp.ne.s32.totalorder %s772, %s774
      %p781 = scmp.eq.s32.totalorder %s92, 1
      %p782 = por %p780, %p781
      %p783 = scmp.ne.s32.totalorder %s774, %s775
      %p784 = scmp.eq.s32.totalorder %s92, 0
      %p785 = por %p783, %p784
      %p786 = scmp.ne.s32.totalorder %s774, %s775
      %p787 = scmp.eq.s32.totalorder %s93, 1
      %p788 = por %p786, %p787
      %p790 = scmp.ne.s32.totalorder %s775, %s789
      %p791 = scmp.eq.s32.totalorder %s93, 0
      %p792 = por %p790, %p791
      %s794 = sadd.s32 %s793, 1
      %p797 = scmp.eq.s32.totalorder %s87, 1
      %p798 = scmp.ne.s32.totalorder %s793, %s795
      %p799 = scmp.eq.s32.totalorder %s87, 0
      %p800 = por %p798, %p799
      %p801 = scmp.ne.s32.totalorder %s793, %s795
      %p802 = scmp.eq.s32.totalorder %s92, 1
      %p803 = por %p801, %p802
      %p804 = scmp.ne.s32.totalorder %s795, %s796
      %p805 = scmp.eq.s32.totalorder %s92, 0
      %p806 = por %p804, %p805
      %p807 = scmp.ne.s32.totalorder %s795, %s796
      %p808 = scmp.eq.s32.totalorder %s93, 1
      %p809 = por %p807, %p808
      %p811 = scmp.ne.s32.totalorder %s796, %s810
      %p812 = scmp.eq.s32.totalorder %s93, 0
      %p813 = por %p811, %p812
      %s815 = sadd.s32 %s814, 1
      %p818 = scmp.eq.s32.totalorder %s87, 1
      %p819 = scmp.ne.s32.totalorder %s814, %s816
      %p820 = scmp.eq.s32.totalorder %s87, 0
      %p821 = por %p819, %p820
      %p822 = scmp.ne.s32.totalorder %s814, %s816
      %p823 = scmp.eq.s32.totalorder %s92, 1
      %p824 = por %p822, %p823
      %p825 = scmp.ne.s32.totalorder %s816, %s817
      %p826 = scmp.eq.s32.totalorder %s92, 0
      %p827 = por %p825, %p826
      %p828 = scmp.ne.s32.totalorder %s816, %s817
      %p829 = scmp.eq.s32.totalorder %s93, 1
      %p830 = por %p828, %p829
      %p832 = scmp.ne.s32.totalorder %s817, %s831
      %p833 = scmp.eq.s32.totalorder %s93, 0
      %p834 = por %p832, %p833
      %s835 = ssub.s32 %s87, %s94
      %p836 = scmp.eq.s32.totalorder %s835, 0
      %s838 = sadd.s32 %s837, 1
      %s839 = scalar_select %p836, %s837, %s838
      %p842 = pneg %p836
      %p843 = scmp.eq.s32.totalorder %s87, 1
      %p844 = por %p842, %p843
      %p845 = scmp.ne.s32.totalorder %s837, %s840
      %p846 = scmp.eq.s32.totalorder %s87, 0
      %p847 = por %p845, %p846
      %p848 = scmp.ne.s32.totalorder %s837, %s840
      %p849 = scmp.eq.s32.totalorder %s92, 1
      %p850 = por %p848, %p849
      %p851 = scmp.ne.s32.totalorder %s840, %s841
      %p852 = scmp.eq.s32.totalorder %s92, 0
      %p853 = por %p851, %p852
      %p854 = scmp.ne.s32.totalorder %s840, %s841
      %p855 = scmp.eq.s32.totalorder %s93, 1
      %p856 = por %p854, %p855
      %p858 = scmp.ne.s32.totalorder %s841, %s857
      %p859 = scmp.eq.s32.totalorder %s93, 0
      %p860 = por %p858, %p859
      %s861 = ssub.s32 %s87, %s94
      %p862 = scmp.eq.s32.totalorder %s861, 0
      %s864 = sadd.s32 %s863, 1
      %s865 = scalar_select %p862, %s863, %s864
      %p868 = pneg %p862
      %p869 = scmp.eq.s32.totalorder %s87, 1
      %p870 = por %p868, %p869
      %p871 = scmp.ne.s32.totalorder %s863, %s866
      %p872 = scmp.eq.s32.totalorder %s87, 0
      %p873 = por %p871, %p872
      %p874 = scmp.ne.s32.totalorder %s863, %s866
      %p875 = scmp.eq.s32.totalorder %s92, 1
      %p876 = por %p874, %p875
      %p877 = scmp.ne.s32.totalorder %s866, %s867
      %p878 = scmp.eq.s32.totalorder %s92, 0
      %p879 = por %p877, %p878
      %p880 = scmp.ne.s32.totalorder %s866, %s867
      %p881 = scmp.eq.s32.totalorder %s93, 1
      %p882 = por %p880, %p881
      %p884 = scmp.ne.s32.totalorder %s867, %s883
      %p885 = scmp.eq.s32.totalorder %s93, 0
      %p886 = por %p884, %p885
      %p887 = scmp.le.s32.totalorder 1, %s87
      %p888 = scmp.lt.s32.totalorder %s87, 3
      %p889 = pnand %p887, %p888
      %p890 = pneg %p889
      // Predicated region
      $region9: #{tpu_custom_call.1} parent=5 // pred_check
        _
      $region10: #{tpu_custom_call.1} parent=5 // pred_check_branch
        %892 = sbr.rel (%p889) target = $region12
      $region11: #{tpu_custom_call.1} parent=5 // pred_region
        %s893 = ssub.s32 %s87, 1
        // Predicated region
        $region13: #{tpu_custom_call.1} parent=11 // pred_check
          %p894 = pneg %p134
        $region14: #{tpu_custom_call.1} parent=11 // pred_check_branch
          %896 = sbr.rel (%p894) target = $region16
        $region15: #{tpu_custom_call.1} parent=11 // pred_region
          _
        $region16: #{tpu_custom_call.1} parent=11 // pred_fallthru
          _
        // Predicated region
        $region17: #{tpu_custom_call.1} parent=11 // pred_check
          %p897 = pneg %p155
        $region18: #{tpu_custom_call.1} parent=11 // pred_check_branch
          %899 = sbr.rel (%p897) target = $region20
        $region19: #{tpu_custom_call.1} parent=11 // pred_region
          _
        $region20: #{tpu_custom_call.1} parent=11 // pred_fallthru
          _
        // Predicated region
        $region21: #{tpu_custom_call.1} parent=11 // pred_check
          %p900 = pneg %p176
        $region22: #{tpu_custom_call.1} parent=11 // pred_check_branch
          %902 = sbr.rel (%p900) target = $region24
        $region23: #{tpu_custom_call.1} parent=11 // pred_region
          _
        $region24: #{tpu_custom_call.1} parent=11 // pred_fallthru
          _
        // Predicated region
        $region25: #{tpu_custom_call.1} parent=11 // pred_check
          %p903 = pneg %p197
        $region26: #{tpu_custom_call.1} parent=11 // pred_check_branch
          %905 = sbr.rel (%p903) target = $region28
        $region27: #{tpu_custom_call.1} parent=11 // pred_region
          _
        $region28: #{tpu_custom_call.1} parent=11 // pred_fallthru
          _
        // Predicated region
        $region29: #{tpu_custom_call.1} parent=11 // pred_check
          %p906 = pneg %p218
        $region30: #{tpu_custom_call.1} parent=11 // pred_check_branch
          %908 = sbr.rel (%p906) target = $region32
        $region31: #{tpu_custom_call.1} parent=11 // pred_region
          _
        $region32: #{tpu_custom_call.1} parent=11 // pred_fallthru
          _
        // Predicated region
        $region33: #{tpu_custom_call.1} parent=11 // pred_check
          %p909 = pneg %p239
        $region34: #{tpu_custom_call.1} parent=11 // pred_check_branch
          %911 = sbr.rel (%p909) target = $region36
        $region35: #{tpu_custom_call.1} parent=11 // pred_region
          _
        $region36: #{tpu_custom_call.1} parent=11 // pred_fallthru
          _
        // Predicated region
        $region37: #{tpu_custom_call.1} parent=11 // pred_check
          %p912 = pneg %p260
        $region38: #{tpu_custom_call.1} parent=11 // pred_check_branch
          %914 = sbr.rel (%p912) target = $region40
        $region39: #{tpu_custom_call.1} parent=11 // pred_region
          _
        $region40: #{tpu_custom_call.1} parent=11 // pred_fallthru
          _
        // Predicated region
        $region41: #{tpu_custom_call.1} parent=11 // pred_check
          %p915 = pneg %p281
        $region42: #{tpu_custom_call.1} parent=11 // pred_check_branch
          %917 = sbr.rel (%p915) target = $region44
        $region43: #{tpu_custom_call.1} parent=11 // pred_region
          _
        $region44: #{tpu_custom_call.1} parent=11 // pred_fallthru
          _
        // Predicated region
        $region45: #{tpu_custom_call.1} parent=11 // pred_check
          %p918 = pneg %p302
        $region46: #{tpu_custom_call.1} parent=11 // pred_check_branch
          %920 = sbr.rel (%p918) target = $region48
        $region47: #{tpu_custom_call.1} parent=11 // pred_region
          _
        $region48: #{tpu_custom_call.1} parent=11 // pred_fallthru
          _
        // Predicated region
        $region49: #{tpu_custom_call.1} parent=11 // pred_check
          %p921 = pneg %p323
        $region50: #{tpu_custom_call.1} parent=11 // pred_check_branch
          %923 = sbr.rel (%p921) target = $region52
        $region51: #{tpu_custom_call.1} parent=11 // pred_region
          _
        $region52: #{tpu_custom_call.1} parent=11 // pred_fallthru
          _
        // Predicated region
        $region53: #{tpu_custom_call.1} parent=11 // pred_check
          %p924 = pneg %p344
        $region54: #{tpu_custom_call.1} parent=11 // pred_check_branch
          %926 = sbr.rel (%p924) target = $region56
        $region55: #{tpu_custom_call.1} parent=11 // pred_region
          _
        $region56: #{tpu_custom_call.1} parent=11 // pred_fallthru
          _
        // Predicated region
        $region57: #{tpu_custom_call.1} parent=11 // pred_check
          %p927 = pneg %p365
        $region58: #{tpu_custom_call.1} parent=11 // pred_check_branch
          %929 = sbr.rel (%p927) target = $region60
        $region59: #{tpu_custom_call.1} parent=11 // pred_region
          _
        $region60: #{tpu_custom_call.1} parent=11 // pred_fallthru
          _
        // Predicated region
        $region61: #{tpu_custom_call.1} parent=11 // pred_check
          %p930 = pneg %p386
        $region62: #{tpu_custom_call.1} parent=11 // pred_check_branch
          %932 = sbr.rel (%p930) target = $region64
        $region63: #{tpu_custom_call.1} parent=11 // pred_region
          _
        $region64: #{tpu_custom_call.1} parent=11 // pred_fallthru
          _
        // Predicated region
        $region65: #{tpu_custom_call.1} parent=11 // pred_check
          %p933 = pneg %p407
        $region66: #{tpu_custom_call.1} parent=11 // pred_check_branch
          %935 = sbr.rel (%p933) target = $region68
        $region67: #{tpu_custom_call.1} parent=11 // pred_region
          _
        $region68: #{tpu_custom_call.1} parent=11 // pred_fallthru
          _
        // Predicated region
        $region69: #{tpu_custom_call.1} parent=11 // pred_check
          %p936 = pneg %p428
        $region70: #{tpu_custom_call.1} parent=11 // pred_check_branch
          %938 = sbr.rel (%p936) target = $region72
        $region71: #{tpu_custom_call.1} parent=11 // pred_region
          %940 = vsyncadd [#allocation3], 0
          %s941 = sshll.u32 %s31, 4
          %s942 = int_to_ptr.hbm [resolvable:$true] %s941
          %s943 = sshll.u32 [#allocation2], 4
          %s944 = int_to_ptr.vmem [resolvable:$true] %s943
          %949 = dma.hbm_to_vmem [thread:$0]  %s942, 512, %s944, [#allocation3], 128, 128, 8
        $region72: #{tpu_custom_call.1} parent=11 // pred_fallthru
          _
        // Predicated region
        $region73: #{tpu_custom_call.1} parent=11 // pred_check
          %p950 = pneg %p449
        $region74: #{tpu_custom_call.1} parent=11 // pred_check_branch
          %952 = sbr.rel (%p950) target = $region76
        $region75: #{tpu_custom_call.1} parent=11 // pred_region
          _
        $region76: #{tpu_custom_call.1} parent=11 // pred_fallthru
          _
        // Predicated region
        $region77: #{tpu_custom_call.1} parent=11 // pred_check
          %p953 = pneg %p470
        $region78: #{tpu_custom_call.1} parent=11 // pred_check_branch
          %955 = sbr.rel (%p953) target = $region80
        $region79: #{tpu_custom_call.1} parent=11 // pred_region
          %957 = vsyncadd [#allocation6], 0
          %s958 = sshll.u32 %s35, 4
          %s959 = int_to_ptr.hbm [resolvable:$true] %s958
          %s960 = sshll.u32 [#allocation5], 4
          %s961 = int_to_ptr.vmem [resolvable:$true] %s960
          %966 = dma.hbm_to_vmem [thread:$0]  %s959, 512, %s961, [#allocation6], 128, 128, 8
        $region80: #{tpu_custom_call.1} parent=11 // pred_fallthru
          _
        // Predicated region
        $region81: #{tpu_custom_call.1} parent=11 // pred_check
          %p967 = pneg %p491
        $region82: #{tpu_custom_call.1} parent=11 // pred_check_branch
          %969 = sbr.rel (%p967) target = $region84
        $region83: #{tpu_custom_call.1} parent=11 // pred_region
          _
        $region84: #{tpu_custom_call.1} parent=11 // pred_fallthru
          _
        // Predicated region
        $region85: #{tpu_custom_call.1} parent=11 // pred_check
          %p970 = pneg %p512
        $region86: #{tpu_custom_call.1} parent=11 // pred_check_branch
          %972 = sbr.rel (%p970) target = $region88
        $region87: #{tpu_custom_call.1} parent=11 // pred_region
          _
        $region88: #{tpu_custom_call.1} parent=11 // pred_fallthru
          _
        // Predicated region
        $region89: #{tpu_custom_call.1} parent=11 // pred_check
          %p973 = pneg %p533
        $region90: #{tpu_custom_call.1} parent=11 // pred_check_branch
          %975 = sbr.rel (%p973) target = $region92
        $region91: #{tpu_custom_call.1} parent=11 // pred_region
          _
        $region92: #{tpu_custom_call.1} parent=11 // pred_fallthru
          _
        // Predicated region
        $region93: #{tpu_custom_call.1} parent=11 // pred_check
          %p976 = pneg %p554
        $region94: #{tpu_custom_call.1} parent=11 // pred_check_branch
          %978 = sbr.rel (%p976) target = $region96
        $region95: #{tpu_custom_call.1} parent=11 // pred_region
          %980 = vsyncadd [#allocation6], 0
          %s981 = sshll.u32 %s43, 4
          %s982 = int_to_ptr.hbm [resolvable:$true] %s981
          %s983 = sshll.u32 [#allocation7], 4
          %s984 = int_to_ptr.vmem [resolvable:$true] %s983
          %989 = dma.hbm_to_vmem [thread:$0]  %s982, 512, %s984, [#allocation6], 128, 128, 8
        $region96: #{tpu_custom_call.1} parent=11 // pred_fallthru
          _
        // Predicated region
        $region97: #{tpu_custom_call.1} parent=11 // pred_check
          %p990 = pneg %p575
        $region98: #{tpu_custom_call.1} parent=11 // pred_check_branch
          %992 = sbr.rel (%p990) target = $region100
        $region99: #{tpu_custom_call.1} parent=11 // pred_region
          _
        $region100: #{tpu_custom_call.1} parent=11 // pred_fallthru
          _
        // Predicated region
        $region101: #{tpu_custom_call.1} parent=11 // pred_check
          %p993 = pneg %p596
        $region102: #{tpu_custom_call.1} parent=11 // pred_check_branch
          %995 = sbr.rel (%p993) target = $region104
        $region103: #{tpu_custom_call.1} parent=11 // pred_region
          %997 = vsyncadd [#allocation9], 0
          %s998 = sshll.u32 %s47, 4
          %s999 = int_to_ptr.hbm [resolvable:$true] %s998
          %s1000 = sshll.u32 [#allocation8], 4
          %s1001 = int_to_ptr.vmem [resolvable:$true] %s1000
          %1006 = dma.hbm_to_vmem [thread:$0]  %s999, 512, %s1001, [#allocation9], 128, 128, 8
        $region104: #{tpu_custom_call.1} parent=11 // pred_fallthru
          _
        // Predicated region
        $region105: #{tpu_custom_call.1} parent=11 // pred_check
          %p1007 = pneg %p617
        $region106: #{tpu_custom_call.1} parent=11 // pred_check_branch
          %1009 = sbr.rel (%p1007) target = $region108
        $region107: #{tpu_custom_call.1} parent=11 // pred_region
          _
        $region108: #{tpu_custom_call.1} parent=11 // pred_fallthru
          _
        // Predicated region
        $region109: #{tpu_custom_call.1} parent=11 // pred_check
          %p1010 = pneg %p638
        $region110: #{tpu_custom_call.1} parent=11 // pred_check_branch
          %1012 = sbr.rel (%p1010) target = $region112
        $region111: #{tpu_custom_call.1} parent=11 // pred_region
          _
        $region112: #{tpu_custom_call.1} parent=11 // pred_fallthru
          _
        // Predicated region
        $region113: #{tpu_custom_call.1} parent=11 // pred_check
          %p1013 = pneg %p659
        $region114: #{tpu_custom_call.1} parent=11 // pred_check_branch
          %1015 = sbr.rel (%p1013) target = $region116
        $region115: #{tpu_custom_call.1} parent=11 // pred_region
          _
        $region116: #{tpu_custom_call.1} parent=11 // pred_fallthru
          _
        // Predicated region
        $region117: #{tpu_custom_call.1} parent=11 // pred_check
          %p1016 = pneg %p680
        $region118: #{tpu_custom_call.1} parent=11 // pred_check_branch
          %1018 = sbr.rel (%p1016) target = $region120
        $region119: #{tpu_custom_call.1} parent=11 // pred_region
          %1020 = vsyncadd [#allocation9], 0
          %s1021 = sshll.u32 %s55, 4
          %s1022 = int_to_ptr.hbm [resolvable:$true] %s1021
          %s1023 = sshll.u32 [#allocation10], 4
          %s1024 = int_to_ptr.vmem [resolvable:$true] %s1023
          %1029 = dma.hbm_to_vmem [thread:$0]  %s1022, 512, %s1024, [#allocation9], 128, 128, 8
        $region120: #{tpu_custom_call.1} parent=11 // pred_fallthru
          _
        // Predicated region
        $region121: #{tpu_custom_call.1} parent=11 // pred_check
          %p1030 = pneg %p701
        $region122: #{tpu_custom_call.1} parent=11 // pred_check_branch
          %1032 = sbr.rel (%p1030) target = $region124
        $region123: #{tpu_custom_call.1} parent=11 // pred_region
          _
        $region124: #{tpu_custom_call.1} parent=11 // pred_fallthru
          _
        // Predicated region
        $region125: #{tpu_custom_call.1} parent=11 // pred_check
          %p1033 = pneg %p722
        $region126: #{tpu_custom_call.1} parent=11 // pred_check_branch
          %1035 = sbr.rel (%p1033) target = $region128
        $region127: #{tpu_custom_call.1} parent=11 // pred_region
          %1037 = vsyncadd [#allocation12], 0
          %s1038 = sshll.u32 %s59, 4
          %s1039 = int_to_ptr.hbm [resolvable:$true] %s1038
          %s1040 = sshll.u32 [#allocation11], 4
          %s1041 = int_to_ptr.vmem [resolvable:$true] %s1040
          %1046 = dma.hbm_to_vmem [thread:$0]  %s1039, 512, %s1041, [#allocation12], 128, 128, 8
        $region128: #{tpu_custom_call.1} parent=11 // pred_fallthru
          _
        // Predicated region
        $region129: #{tpu_custom_call.1} parent=11 // pred_check
          %p1047 = pneg %p743
        $region130: #{tpu_custom_call.1} parent=11 // pred_check_branch
          %1049 = sbr.rel (%p1047) target = $region132
        $region131: #{tpu_custom_call.1} parent=11 // pred_region
          _
        $region132: #{tpu_custom_call.1} parent=11 // pred_fallthru
          _
        // Predicated region
        $region133: #{tpu_custom_call.1} parent=11 // pred_check
          %p1050 = pneg %p764
        $region134: #{tpu_custom_call.1} parent=11 // pred_check_branch
          %1052 = sbr.rel (%p1050) target = $region136
        $region135: #{tpu_custom_call.1} parent=11 // pred_region
          _
        $region136: #{tpu_custom_call.1} parent=11 // pred_fallthru
          _
        // Predicated region
        $region137: #{tpu_custom_call.1} parent=11 // pred_check
          %p1053 = pneg %p785
        $region138: #{tpu_custom_call.1} parent=11 // pred_check_branch
          %1055 = sbr.rel (%p1053) target = $region140
        $region139: #{tpu_custom_call.1} parent=11 // pred_region
          _
        $region140: #{tpu_custom_call.1} parent=11 // pred_fallthru
          _
        // Predicated region
        $region141: #{tpu_custom_call.1} parent=11 // pred_check
          %p1056 = pneg %p806
        $region142: #{tpu_custom_call.1} parent=11 // pred_check_branch
          %1058 = sbr.rel (%p1056) target = $region144
        $region143: #{tpu_custom_call.1} parent=11 // pred_region
          _
        $region144: #{tpu_custom_call.1} parent=11 // pred_fallthru
          _
        // Predicated region
        $region145: #{tpu_custom_call.1} parent=11 // pred_check
          %p1059 = pneg %p827
        $region146: #{tpu_custom_call.1} parent=11 // pred_check_branch
          %1061 = sbr.rel (%p1059) target = $region148
        $region147: #{tpu_custom_call.1} parent=11 // pred_region
          _
        $region148: #{tpu_custom_call.1} parent=11 // pred_fallthru
          _
      $region12: #{tpu_custom_call.1} parent=5 // pred_fallthru
        _
      %p1062 = scmp.lt.s32.totalorder %s87, 2
      // Predicated region
      $region149: #{tpu_custom_call.1} parent=5 // pred_check
        %p1063 = pneg %p1062
      $region150: #{tpu_custom_call.1} parent=5 // pred_check_branch
        %1065 = sbr.rel (%p1063) target = $region152
      $region151: #{tpu_custom_call.1} parent=5 // pred_region
        // Predicated region
        $region153: #{tpu_custom_call.1} parent=151 // pred_check
          %p1066 = pneg %p107
        $region154: #{tpu_custom_call.1} parent=151 // pred_check_branch
          %1068 = sbr.rel (%p1066) target = $region156
        $region155: #{tpu_custom_call.1} parent=151 // pred_region
          %p1069 = scmp.lt.s32.totalorder %s87, 1
          %s1070 = scalar_select %p1069, %s87, 1
          %s1071 = smul.addr %s1070, 2
          %s1072 = smul.addr %s1071, 8
          %s1073 = scalar_lea.vmem %s1, %s1072
        $region156: #{tpu_custom_call.1} parent=151 // pred_fallthru
          _
      $region152: #{tpu_custom_call.1} parent=5 // pred_fallthru
        _
      %p1074 = scmp.le.s32.totalorder 1, %s87
      %p1075 = scmp.lt.s32.totalorder %s87, 3
      %p1076 = pnand %p1074, %p1075
      %p1077 = pneg %p1076
      // Predicated region
      $region157: #{tpu_custom_call.1} parent=5 // pred_check
        _
      $region158: #{tpu_custom_call.1} parent=5 // pred_check_branch
        %1079 = sbr.rel (%p1076) target = $region160
      $region159: #{tpu_custom_call.1} parent=5 // pred_region
        %s1080 = ssub.s32 %s87, 1
        // Predicated region
        $region161: #{tpu_custom_call.1} parent=159 // pred_check
          %p1081 = pneg %p428
        $region162: #{tpu_custom_call.1} parent=159 // pred_check_branch
          %1083 = sbr.rel (%p1081) target = $region164
        $region163: #{tpu_custom_call.1} parent=159 // pred_region
          %1085 = dma.done [#allocation3], 512
        $region164: #{tpu_custom_call.1} parent=159 // pred_fallthru
          _
        // Predicated region
        $region165: #{tpu_custom_call.1} parent=159 // pred_check
          %p1086 = pneg %p470
        $region166: #{tpu_custom_call.1} parent=159 // pred_check_branch
          %1088 = sbr.rel (%p1086) target = $region168
        $region167: #{tpu_custom_call.1} parent=159 // pred_region
          %1090 = dma.done [#allocation6], 512
        $region168: #{tpu_custom_call.1} parent=159 // pred_fallthru
          _
        // Predicated region
        $region169: #{tpu_custom_call.1} parent=159 // pred_check
          %p1091 = pneg %p554
        $region170: #{tpu_custom_call.1} parent=159 // pred_check_branch
          %1093 = sbr.rel (%p1091) target = $region172
        $region171: #{tpu_custom_call.1} parent=159 // pred_region
          %1095 = dma.done [#allocation6], 512
        $region172: #{tpu_custom_call.1} parent=159 // pred_fallthru
          _
        // Predicated region
        $region173: #{tpu_custom_call.1} parent=159 // pred_check
          %p1096 = pneg %p596
        $region174: #{tpu_custom_call.1} parent=159 // pred_check_branch
          %1098 = sbr.rel (%p1096) target = $region176
        $region175: #{tpu_custom_call.1} parent=159 // pred_region
          %1100 = dma.done [#allocation9], 512
        $region176: #{tpu_custom_call.1} parent=159 // pred_fallthru
          _
        // Predicated region
        $region177: #{tpu_custom_call.1} parent=159 // pred_check
          %p1101 = pneg %p680
        $region178: #{tpu_custom_call.1} parent=159 // pred_check_branch
          %1103 = sbr.rel (%p1101) target = $region180
        $region179: #{tpu_custom_call.1} parent=159 // pred_region
          %1105 = dma.done [#allocation9], 512
        $region180: #{tpu_custom_call.1} parent=159 // pred_fallthru
          _
        // Predicated region
        $region181: #{tpu_custom_call.1} parent=159 // pred_check
          %p1106 = pneg %p722
        $region182: #{tpu_custom_call.1} parent=159 // pred_check_branch
          %1108 = sbr.rel (%p1106) target = $region184
        $region183: #{tpu_custom_call.1} parent=159 // pred_region
          %1110 = dma.done [#allocation12], 512
        $region184: #{tpu_custom_call.1} parent=159 // pred_fallthru
          _
        %p1111 = scmp.lt.s32.totalorder %s92, 1
        %s1112 = scalar_select %p1111, %s92, 1
        %s1113 = smul.addr %s1112, 2
        %s1114 = smul.addr %s1113, 8
        %s1115 = scalar_lea.vmem %s1, %s1114
        %p1116 = pneg %p113
        %p1117 = pneg %p110
        %p1118 = pneg %p134
        %p1119 = pneg %p131
        %p1120 = pneg %p155
        %p1121 = pneg %p152
        %p1122 = pneg %p176
        %p1123 = pneg %p173
        %p1124 = pneg %p197
        %p1125 = pneg %p194
        %p1126 = pneg %p218
        %p1127 = pneg %p215
        %p1128 = pneg %p239
        %p1129 = pneg %p236
        %p1130 = pneg %p260
        %p1131 = pneg %p257
        %p1132 = pneg %p281
        %p1133 = pneg %p278
        %p1134 = pneg %p302
        %p1135 = pneg %p299
        %p1136 = pneg %p323
        %p1137 = pneg %p320
        %p1138 = pneg %p344
        %p1139 = pneg %p341
        %p1140 = pneg %p365
        %p1141 = pneg %p362
        %p1142 = pneg %p386
        %p1143 = pneg %p383
        %p1144 = pneg %p407
        %p1145 = pneg %p404
        %p1146 = pneg %p428
        %p1147 = pneg %p425
        %p1148 = pneg %p449
        %p1149 = pneg %p446
        %p1150 = pneg %p470
        %p1151 = pneg %p467
        %p1152 = pneg %p491
        %p1153 = pneg %p488
        %p1154 = pneg %p512
        %p1155 = pneg %p509
        %p1156 = pneg %p533
        %p1157 = pneg %p530
        %p1158 = pneg %p554
        %p1159 = pneg %p551
        %p1160 = pneg %p575
        %p1161 = pneg %p572
        %p1162 = pneg %p596
        %p1163 = pneg %p593
        %p1164 = pneg %p617
        %p1165 = pneg %p614
        %p1166 = pneg %p638
        %p1167 = pneg %p635
        %p1168 = pneg %p659
        %p1169 = pneg %p656
        %p1170 = pneg %p680
        %p1171 = pneg %p677
        %p1172 = pneg %p701
        %p1173 = pneg %p698
        %p1174 = pneg %p722
        %p1175 = pneg %p719
        %p1176 = pneg %p743
        %p1177 = pneg %p740
        %p1178 = pneg %p764
        %p1179 = pneg %p761
        %p1180 = pneg %p785
        %p1181 = pneg %p782
        %p1182 = pneg %p806
        %p1183 = pneg %p803
        %p1184 = pneg %p827
        %p1185 = pneg %p824
        %p1186 = pneg %p853
        %p1187 = pneg %p850
        %p1188 = scmp.lt.s32.totalorder %s92, 1
        %s1189 = scalar_select %p1188, %s92, 1
        %s1190 = smul.addr %s1189, 2
        %s1191 = smul.addr %s1190, 8
        %s1192 = scalar_lea.vmem %s71, %s1191
        %p1193 = pneg %p879
        %p1194 = pneg %p876
        %s1195 = sand.u32 %s866, 1
        %s1196 = scalar_lea.sflag [#allocation4], %s1195
        %s1197 = sand.u32 %s866, 1
        %s1198 = smul.addr %s1197, 4
        %s1199 = scalar_lea.vmem [#allocation13], %s1198
        %p1200 = scmp.lt.s32.totalorder %s92, 1
        %s1201 = scalar_select %p1200, %s92, 1
        %s1202 = smul.addr %s1201, 2
        %s1203 = smul.addr %s1202, 8
        %s1204 = scalar_lea.vmem %s1, %s1203
        %p1205 = scmp.lt.s32.totalorder %s92, 1
        %s1206 = scalar_select %p1205, %s92, 1
        %s1207 = smul.addr %s1206, 2
        %s1208 = smul.addr %s1207, 8
        %s1209 = scalar_lea.vmem %s71, %s1208
        %v1210 = vld [vmem:[%s1204] sm:$0xff]
        %v1211 = vld [vmem:[%s1204 + $0x8] sm:$0xff]
        %v1212 = vld [vmem:[%s3] sm:$0xf]
        %v1213 = vld [vmem:[%s5] sm:$0x1]
        %v1215 = vperm.slane %v1213, 0
        %vm1217 = vcmask 31744
        %v1219 = vsel %vm1217, %v1210, 0
        %v1222 = vsel %vm1217, %v1211, 0
        %vm1224 = vcmask 1043456
        %v1226 = vsel %vm1224, %v1212, 0
        %1228 = vmatpush.msra.mxu0 0.0
        %1229 = vmatpush.msra.mxu0 0.0
        %1230 = vmatpush.msra.mxu0 0.0
        %1231 = vmatpush.msra.mxu0 0.0
        %1232 = vmatpush.msra.mxu0 0.0
        %1233 = vmatpush.msra.mxu0 0.0
        %1234 = vmatpush.msra.mxu0 0.0
        %1235 = vmatpush.msra.mxu0 0.0
        %1236 = vmatpush.msra.mxu0 0.0
        %1237 = vmatpush.msra.mxu0 0.0
        %1238 = vmatpush.msra.mxu0 0.0
        %1239 = vmatpush.msra.mxu0 0.0
        %1240 = vmatpush.msra.mxu0 0.0
        %1241 = vmatpush.msra.mxu0 0.0
        %1242 = vmatpush.msra.mxu0 0.0
        %1243 = vmatpush.msra.mxu0 %v1226
        %1244 = vmatmul.f32.gmra.mxu0 %v1219
        %v1245 = vpop.f32.mrf.mxu0
        %v1246 = vadd.f32 %v1215, %v1245
        %1247 = vmatmul.f32.gmra.mxu0 %v1222
        %v1248 = vpop.f32.mrf.mxu0
        %v1249 = vadd.f32 %v1215, %v1248
        %1250 = vdwg.mxu0
        %v1251 = vld [vmem:[%s7] sm:$0xff]
        %v1252 = vld [vmem:[%s7 + $0x8] sm:$0xff]
        %v1253 = vld [vmem:[%s7 + $0x10] sm:$0xff]
        %v1254 = vld [vmem:[%s7 + $0x18] sm:$0xff]
        %v1255 = vld [vmem:[%s9] sm:$0x1]
        %v1257 = vperm.slane %v1255, 0
        %vm1259 = vcmask 261120
        %v1261 = vsel %vm1259, %v1246, 0
        %v1264 = vsel %vm1259, %v1249, 0
        %1266 = vmatpush.msra.mxu0 0.0
        %1267 = vmatpush.msra.mxu0 0.0
        %1268 = vmatpush.msra.mxu0 0.0
        %1269 = vmatpush.msra.mxu0 0.0
        %1270 = vmatpush.msra.mxu0 0.0
        %1271 = vmatpush.msra.mxu0 0.0
        %1272 = vmatpush.msra.mxu0 0.0
        %1273 = vmatpush.msra.mxu0 0.0
        %1274 = vmatpush.msra.mxu0 0.0
        %1275 = vmatpush.msra.mxu0 0.0
        %1276 = vmatpush.msra.mxu0 0.0
        %1277 = vmatpush.msra.mxu0 0.0
        %1278 = vmatpush.msra.mxu0 %v1254
        %1279 = vmatpush.msra.mxu0 %v1253
        %1280 = vmatpush.msra.mxu0 %v1252
        %1281 = vmatpush.msra.mxu0 %v1251
        %1282 = vmatmul.f32.gmra.mxu0 %v1261
        %v1283 = vpop.f32.mrf.mxu0
        %v1284 = vadd.f32 %v1257, %v1283
        %1285 = vmatmul.f32.gmra.mxu0 %v1264
        %v1286 = vpop.f32.mrf.mxu0
        %v1287 = vadd.f32 %v1257, %v1286
        %1288 = vdwg.mxu0
        %vm1289 = vcmp.gt.f32.partialorder %v1284, 0.0
        %vm1290 = vcmp.gt.f32.partialorder %v1287, 0.0
        %v1291 = vmul.f32 %v1284, 0.2
        %v1292 = vmul.f32 %v1287, 0.2
        %v1293 = vsel %vm1289, %v1284, %v1291
        %v1294 = vsel %vm1290, %v1287, %v1292
        %v1295 = vld [vmem:[%s11] sm:$0xff]
        %v1296 = vld [vmem:[%s11 + $0x8] sm:$0xff]
        %v1297 = vld [vmem:[%s11 + $0x10] sm:$0xff]
        %v1298 = vld [vmem:[%s11 + $0x18] sm:$0xff]
        %v1299 = vld [vmem:[%s13] sm:$0x1]
        %v1301 = vperm.slane %v1299, 0
        %v1304 = vsel %vm1259, %v1293, 0
        %v1307 = vsel %vm1259, %v1294, 0
        %1309 = vmatpush.msra.mxu0 0.0
        %1310 = vmatpush.msra.mxu0 0.0
        %1311 = vmatpush.msra.mxu0 0.0
        %1312 = vmatpush.msra.mxu0 0.0
        %1313 = vmatpush.msra.mxu0 0.0
        %1314 = vmatpush.msra.mxu0 0.0
        %1315 = vmatpush.msra.mxu0 0.0
        %1316 = vmatpush.msra.mxu0 0.0
        %1317 = vmatpush.msra.mxu0 0.0
        %1318 = vmatpush.msra.mxu0 0.0
        %1319 = vmatpush.msra.mxu0 0.0
        %1320 = vmatpush.msra.mxu0 0.0
        %1321 = vmatpush.msra.mxu0 %v1298
        %1322 = vmatpush.msra.mxu0 %v1297
        %1323 = vmatpush.msra.mxu0 %v1296
        %1324 = vmatpush.msra.mxu0 %v1295
        %1325 = vmatmul.f32.gmra.mxu0 %v1304
        %v1326 = vpop.f32.mrf.mxu0
        %v1327 = vadd.f32 %v1301, %v1326
        %1328 = vmatmul.f32.gmra.mxu0 %v1307
        %v1329 = vpop.f32.mrf.mxu0
        %v1330 = vadd.f32 %v1301, %v1329
        %1331 = vdwg.mxu0
        %v1332 = vadd.f32 %v1246, %v1327
        %v1333 = vadd.f32 %v1249, %v1330
        %v1334 = vld [vmem:[%s15] sm:$0xff]
        %v1335 = vld [vmem:[%s17] sm:$0xff]
        %1337 = vset.pattern.permute.xlu0 0
        %1338 = vperm.xlu0 %1337, %v1335
        %v1339 = vpop.permute.xlu0 %1338
        %vm1341 = vcmask 130048
        %v1343 = vsel %vm1341, %v1334, 0
        %1345 = vmatpush.msra.mxu0 0.0
        %1346 = vmatpush.msra.mxu0 0.0
        %1347 = vmatpush.msra.mxu0 0.0
        %1348 = vmatpush.msra.mxu0 0.0
        %1349 = vmatpush.msra.mxu0 0.0
        %1350 = vmatpush.msra.mxu0 0.0
        %1351 = vmatpush.msra.mxu0 0.0
        %1352 = vmatpush.msra.mxu0 0.0
        %1353 = vmatpush.msra.mxu0 0.0
        %1354 = vmatpush.msra.mxu0 0.0
        %1355 = vmatpush.msra.mxu0 0.0
        %1356 = vmatpush.msra.mxu0 0.0
        %1357 = vmatpush.msra.mxu0 0.0
        %1358 = vmatpush.msra.mxu0 0.0
        %1359 = vmatpush.msra.mxu0 %v1333
        %1360 = vmatpush.msra.mxu0 %v1332
        %1361 = vmatmul.f32.gmra.mxu0 %v1343
        %v1362 = vpop.f32.mrf.mxu0
        %v1363 = vadd.f32 %v1339, %v1362
        %1364 = vdwg.mxu0
        %vm1365 = vcmp.gt.f32.partialorder %v1363, 0.0
        %v1366 = vmul.f32 %v1363, 0.2
        %v1367 = vsel %vm1365, %v1363, %v1366
        %v1368 = vld [vmem:[%s19] sm:$0xff]
        %v1369 = vld [vmem:[%s19 + $0x8] sm:$0xff]
        %v1370 = vld [vmem:[%s19 + $0x10] sm:$0xff]
        %v1371 = vld [vmem:[%s19 + $0x18] sm:$0xff]
        %v1372 = vld [vmem:[%s21] sm:$0x1]
        %v1374 = vperm.slane %v1372, 0
        %v1377 = vsel %vm1259, %v1367, 0
        %1379 = vmatpush.msra.mxu0 0.0
        %1380 = vmatpush.msra.mxu0 0.0
        %1381 = vmatpush.msra.mxu0 0.0
        %1382 = vmatpush.msra.mxu0 0.0
        %1383 = vmatpush.msra.mxu0 0.0
        %1384 = vmatpush.msra.mxu0 0.0
        %1385 = vmatpush.msra.mxu0 0.0
        %1386 = vmatpush.msra.mxu0 0.0
        %1387 = vmatpush.msra.mxu0 0.0
        %1388 = vmatpush.msra.mxu0 0.0
        %1389 = vmatpush.msra.mxu0 0.0
        %1390 = vmatpush.msra.mxu0 0.0
        %1391 = vmatpush.msra.mxu0 %v1371
        %1392 = vmatpush.msra.mxu0 %v1370
        %1393 = vmatpush.msra.mxu0 %v1369
        %1394 = vmatpush.msra.mxu0 %v1368
        %1395 = vmatmul.f32.gmra.mxu0 %v1377
        %v1396 = vpop.f32.mrf.mxu0
        %v1397 = vadd.f32 %v1374, %v1396
        %1398 = vdwg.mxu0
        %vm1399 = vcmp.gt.f32.partialorder %v1397, 0.0
        %v1400 = vmul.f32 %v1397, 0.2
        %v1401 = vsel %vm1399, %v1397, %v1400
        %v1402 = vld [vmem:[%s23] sm:$0xff]
        %v1403 = vld [vmem:[%s23 + $0x8] sm:$0xff]
        %v1404 = vld [vmem:[%s23 + $0x10] sm:$0xff]
        %v1405 = vld [vmem:[%s23 + $0x18] sm:$0xff]
        %v1406 = vld [vmem:[%s25] sm:$0x1]
        %v1408 = vperm.slane %v1406, 0
        %v1411 = vsel %vm1259, %v1401, 0
        %1413 = vmatpush.msra.mxu0 0.0
        %1414 = vmatpush.msra.mxu0 0.0
        %1415 = vmatpush.msra.mxu0 0.0
        %1416 = vmatpush.msra.mxu0 0.0
        %1417 = vmatpush.msra.mxu0 0.0
        %1418 = vmatpush.msra.mxu0 0.0
        %1419 = vmatpush.msra.mxu0 0.0
        %1420 = vmatpush.msra.mxu0 0.0
        %1421 = vmatpush.msra.mxu0 0.0
        %1422 = vmatpush.msra.mxu0 0.0
        %1423 = vmatpush.msra.mxu0 0.0
        %1424 = vmatpush.msra.mxu0 0.0
        %1425 = vmatpush.msra.mxu0 %v1405
        %1426 = vmatpush.msra.mxu0 %v1404
        %1427 = vmatpush.msra.mxu0 %v1403
        %1428 = vmatpush.msra.mxu0 %v1402
        %1429 = vmatmul.f32.gmra.mxu0 %v1411
        %v1430 = vpop.f32.mrf.mxu0
        %v1431 = vadd.f32 %v1408, %v1430
        %1432 = vdwg.mxu0
        %v1433 = vadd.f32 %v1367, %v1431
        %v1434 = vld [vmem:[%s27] sm:$0xf]
        %v1435 = vld [vmem:[%s29] sm:$0xf]
        %1437 = vset.pattern.permute.xlu0 0
        %1438 = vperm.xlu0 %1437, %v1435
        %v1439 = vpop.permute.xlu0 %1438
        %vm1441 = vcmask 64512
        %v1443 = vsel %vm1441, %v1434, 0
        %1445 = vmatpush.msra.mxu0 0.0
        %1446 = vmatpush.msra.mxu0 0.0
        %1447 = vmatpush.msra.mxu0 0.0
        %1448 = vmatpush.msra.mxu0 0.0
        %1449 = vmatpush.msra.mxu0 0.0
        %1450 = vmatpush.msra.mxu0 0.0
        %1451 = vmatpush.msra.mxu0 0.0
        %1452 = vmatpush.msra.mxu0 0.0
        %1453 = vmatpush.msra.mxu0 0.0
        %1454 = vmatpush.msra.mxu0 0.0
        %1455 = vmatpush.msra.mxu0 0.0
        %1456 = vmatpush.msra.mxu0 0.0
        %1457 = vmatpush.msra.mxu0 0.0
        %1458 = vmatpush.msra.mxu0 0.0
        %1459 = vmatpush.msra.mxu0 0.0
        %1460 = vmatpush.msra.mxu0 %v1433
        %1461 = vmatmul.f32.gmra.mxu0 %v1443
        %v1462 = vpop.f32.mrf.mxu0
        %v1463 = vadd.f32 %v1439, %v1462
        %1464 = vdwg.mxu0
        %vm1465 = vcmp.gt.f32.partialorder %v1463, 0.0
        %v1466 = vmul.f32 %v1463, 0.2
        %v1467 = vsel %vm1465, %v1463, %v1466
        %v1468 = vld [vmem:[#allocation2] sm:$0xff]
        %v1469 = vld [vmem:[#allocation2 + $0x8] sm:$0xff]
        %v1470 = vld [vmem:[#allocation2 + $0x10] sm:$0xff]
        %v1471 = vld [vmem:[#allocation2 + $0x18] sm:$0xff]
        %v1472 = vld [vmem:[%s33] sm:$0x1]
        %v1474 = vperm.slane %v1472, 0
        %v1477 = vsel %vm1259, %v1467, 0
        %1479 = vmatpush.msra.mxu0 0.0
        %1480 = vmatpush.msra.mxu0 0.0
        %1481 = vmatpush.msra.mxu0 0.0
        %1482 = vmatpush.msra.mxu0 0.0
        %1483 = vmatpush.msra.mxu0 0.0
        %1484 = vmatpush.msra.mxu0 0.0
        %1485 = vmatpush.msra.mxu0 0.0
        %1486 = vmatpush.msra.mxu0 0.0
        %1487 = vmatpush.msra.mxu0 0.0
        %1488 = vmatpush.msra.mxu0 0.0
        %1489 = vmatpush.msra.mxu0 0.0
        %1490 = vmatpush.msra.mxu0 0.0
        %1491 = vmatpush.msra.mxu0 %v1471
        %1492 = vmatpush.msra.mxu0 %v1470
        %1493 = vmatpush.msra.mxu0 %v1469
        %1494 = vmatpush.msra.mxu0 %v1468
        %1495 = vmatmul.f32.gmra.mxu0 %v1477
        %v1496 = vpop.f32.mrf.mxu0
        %v1497 = vadd.f32 %v1474, %v1496
        %1498 = vdwg.mxu0
        %vm1499 = vcmp.gt.f32.partialorder %v1497, 0.0
        %v1500 = vmul.f32 %v1497, 0.2
        %v1501 = vsel %vm1499, %v1497, %v1500
        %v1502 = vld [vmem:[#allocation5] sm:$0xff]
        %v1503 = vld [vmem:[#allocation5 + $0x8] sm:$0xff]
        %v1504 = vld [vmem:[#allocation5 + $0x10] sm:$0xff]
        %v1505 = vld [vmem:[#allocation5 + $0x18] sm:$0xff]
        %v1506 = vld [vmem:[%s37] sm:$0x1]
        %v1508 = vperm.slane %v1506, 0
        %v1511 = vsel %vm1259, %v1501, 0
        %1513 = vmatpush.msra.mxu0 0.0
        %1514 = vmatpush.msra.mxu0 0.0
        %1515 = vmatpush.msra.mxu0 0.0
        %1516 = vmatpush.msra.mxu0 0.0
        %1517 = vmatpush.msra.mxu0 0.0
        %1518 = vmatpush.msra.mxu0 0.0
        %1519 = vmatpush.msra.mxu0 0.0
        %1520 = vmatpush.msra.mxu0 0.0
        %1521 = vmatpush.msra.mxu0 0.0
        %1522 = vmatpush.msra.mxu0 0.0
        %1523 = vmatpush.msra.mxu0 0.0
        %1524 = vmatpush.msra.mxu0 0.0
        %1525 = vmatpush.msra.mxu0 %v1505
        %1526 = vmatpush.msra.mxu0 %v1504
        %1527 = vmatpush.msra.mxu0 %v1503
        %1528 = vmatpush.msra.mxu0 %v1502
        %1529 = vmatmul.f32.gmra.mxu0 %v1511
        %v1530 = vpop.f32.mrf.mxu0
        %v1531 = vadd.f32 %v1508, %v1530
        %1532 = vdwg.mxu0
        %v1533 = vadd.f32 %v1467, %v1531
        %v1534 = vld [vmem:[%s39] sm:$0xff]
        %v1535 = vld [vmem:[%s41] sm:$0xff]
        %1537 = vset.pattern.permute.xlu0 0
        %1538 = vperm.xlu0 %1537, %v1535
        %v1539 = vpop.permute.xlu0 %1538
        %v1542 = vsel %vm1217, %v1534, 0
        %v1545 = vsel %vm1224, %v1533, 0
        %1547 = vmatpush.msra.mxu0 0.0
        %1548 = vmatpush.msra.mxu0 0.0
        %1549 = vmatpush.msra.mxu0 0.0
        %1550 = vmatpush.msra.mxu0 0.0
        %1551 = vmatpush.msra.mxu0 0.0
        %1552 = vmatpush.msra.mxu0 0.0
        %1553 = vmatpush.msra.mxu0 0.0
        %1554 = vmatpush.msra.mxu0 0.0
        %1555 = vmatpush.msra.mxu0 0.0
        %1556 = vmatpush.msra.mxu0 0.0
        %1557 = vmatpush.msra.mxu0 0.0
        %1558 = vmatpush.msra.mxu0 0.0
        %1559 = vmatpush.msra.mxu0 0.0
        %1560 = vmatpush.msra.mxu0 0.0
        %1561 = vmatpush.msra.mxu0 0.0
        %1562 = vmatpush.msra.mxu0 %v1545
        %1563 = vmatmul.f32.gmra.mxu0 %v1542
        %v1564 = vpop.f32.mrf.mxu0
        %v1565 = vadd.f32 %v1539, %v1564
        %1566 = vdwg.mxu0
        %vm1567 = vcmp.gt.f32.partialorder %v1565, 0.0
        %v1568 = vmul.f32 %v1565, 0.2
        %v1569 = vsel %vm1567, %v1565, %v1568
        %v1570 = vadd.f32 %v1569, %v1433
        %v1571 = vld [vmem:[#allocation7] sm:$0xff]
        %v1572 = vld [vmem:[#allocation7 + $0x8] sm:$0xff]
        %v1573 = vld [vmem:[#allocation7 + $0x10] sm:$0xff]
        %v1574 = vld [vmem:[#allocation7 + $0x18] sm:$0xff]
        %v1575 = vld [vmem:[%s45] sm:$0x1]
        %v1577 = vperm.slane %v1575, 0
        %v1580 = vsel %vm1259, %v1570, 0
        %1582 = vmatpush.msra.mxu0 0.0
        %1583 = vmatpush.msra.mxu0 0.0
        %1584 = vmatpush.msra.mxu0 0.0
        %1585 = vmatpush.msra.mxu0 0.0
        %1586 = vmatpush.msra.mxu0 0.0
        %1587 = vmatpush.msra.mxu0 0.0
        %1588 = vmatpush.msra.mxu0 0.0
        %1589 = vmatpush.msra.mxu0 0.0
        %1590 = vmatpush.msra.mxu0 0.0
        %1591 = vmatpush.msra.mxu0 0.0
        %1592 = vmatpush.msra.mxu0 0.0
        %1593 = vmatpush.msra.mxu0 0.0
        %1594 = vmatpush.msra.mxu0 %v1574
        %1595 = vmatpush.msra.mxu0 %v1573
        %1596 = vmatpush.msra.mxu0 %v1572
        %1597 = vmatpush.msra.mxu0 %v1571
        %1598 = vmatmul.f32.gmra.mxu0 %v1580
        %v1599 = vpop.f32.mrf.mxu0
        %v1600 = vadd.f32 %v1577, %v1599
        %1601 = vdwg.mxu0
        %vm1602 = vcmp.gt.f32.partialorder %v1600, 0.0
        %v1603 = vmul.f32 %v1600, 0.2
        %v1604 = vsel %vm1602, %v1600, %v1603
        %v1605 = vld [vmem:[#allocation8] sm:$0xff]
        %v1606 = vld [vmem:[#allocation8 + $0x8] sm:$0xff]
        %v1607 = vld [vmem:[#allocation8 + $0x10] sm:$0xff]
        %v1608 = vld [vmem:[#allocation8 + $0x18] sm:$0xff]
        %v1609 = vld [vmem:[%s49] sm:$0x1]
        %v1611 = vperm.slane %v1609, 0
        %v1614 = vsel %vm1259, %v1604, 0
        %1616 = vmatpush.msra.mxu0 0.0
        %1617 = vmatpush.msra.mxu0 0.0
        %1618 = vmatpush.msra.mxu0 0.0
        %1619 = vmatpush.msra.mxu0 0.0
        %1620 = vmatpush.msra.mxu0 0.0
        %1621 = vmatpush.msra.mxu0 0.0
        %1622 = vmatpush.msra.mxu0 0.0
        %1623 = vmatpush.msra.mxu0 0.0
        %1624 = vmatpush.msra.mxu0 0.0
        %1625 = vmatpush.msra.mxu0 0.0
        %1626 = vmatpush.msra.mxu0 0.0
        %1627 = vmatpush.msra.mxu0 0.0
        %1628 = vmatpush.msra.mxu0 %v1608
        %1629 = vmatpush.msra.mxu0 %v1607
        %1630 = vmatpush.msra.mxu0 %v1606
        %1631 = vmatpush.msra.mxu0 %v1605
        %1632 = vmatmul.f32.gmra.mxu0 %v1614
        %v1633 = vpop.f32.mrf.mxu0
        %v1634 = vadd.f32 %v1611, %v1633
        %1635 = vdwg.mxu0
        %v1636 = vadd.f32 %v1570, %v1634
        %v1637 = vld [vmem:[%s51] sm:$0xff]
        %v1638 = vld [vmem:[%s51 + $0x8] sm:$0xff]
        %v1639 = vld [vmem:[%s53] sm:$0xff]
        %v1640 = vld [vmem:[%s53 + $0x8] sm:$0xff]
        %1642 = vset.pattern.permute.xlu0 0
        %1643 = vperm.xlu0 %1642, %v1639
        %v1644 = vpop.permute.xlu0 %1643
        %1647 = vset.pattern.permute.xlu0 0
        %1648 = vperm.xlu0 %1647, %v1640
        %v1649 = vpop.permute.xlu0 %1648
        %v1652 = vsel %vm1441, %v1637, 0
        %v1655 = vsel %vm1441, %v1638, 0
        %1657 = vmatpush.msra.mxu0 0.0
        %1658 = vmatpush.msra.mxu0 0.0
        %1659 = vmatpush.msra.mxu0 0.0
        %1660 = vmatpush.msra.mxu0 0.0
        %1661 = vmatpush.msra.mxu0 0.0
        %1662 = vmatpush.msra.mxu0 0.0
        %1663 = vmatpush.msra.mxu0 0.0
        %1664 = vmatpush.msra.mxu0 0.0
        %1665 = vmatpush.msra.mxu0 0.0
        %1666 = vmatpush.msra.mxu0 0.0
        %1667 = vmatpush.msra.mxu0 0.0
        %1668 = vmatpush.msra.mxu0 0.0
        %1669 = vmatpush.msra.mxu0 0.0
        %1670 = vmatpush.msra.mxu0 0.0
        %1671 = vmatpush.msra.mxu0 0.0
        %1672 = vmatpush.msra.mxu0 %v1636
        %1673 = vmatmul.f32.gmra.mxu0 %v1652
        %v1674 = vpop.f32.mrf.mxu0
        %v1675 = vadd.f32 %v1644, %v1674
        %1676 = vmatmul.f32.gmra.mxu0 %v1655
        %v1677 = vpop.f32.mrf.mxu0
        %v1678 = vadd.f32 %v1649, %v1677
        %1679 = vdwg.mxu0
        %vm1680 = vcmp.gt.f32.partialorder %v1675, 0.0
        %vm1681 = vcmp.gt.f32.partialorder %v1678, 0.0
        %v1682 = vmul.f32 %v1675, 0.2
        %v1683 = vmul.f32 %v1678, 0.2
        %v1684 = vsel %vm1680, %v1675, %v1682
        %v1685 = vsel %vm1681, %v1678, %v1683
        %v1686 = vadd.f32 %v1684, %v1332
        %v1687 = vadd.f32 %v1685, %v1333
        %v1688 = vld [vmem:[#allocation10] sm:$0xff]
        %v1689 = vld [vmem:[#allocation10 + $0x8] sm:$0xff]
        %v1690 = vld [vmem:[#allocation10 + $0x10] sm:$0xff]
        %v1691 = vld [vmem:[#allocation10 + $0x18] sm:$0xff]
        %v1692 = vld [vmem:[%s57] sm:$0x1]
        %v1694 = vperm.slane %v1692, 0
        %v1697 = vsel %vm1259, %v1686, 0
        %v1700 = vsel %vm1259, %v1687, 0
        %1702 = vmatpush.msra.mxu0 0.0
        %1703 = vmatpush.msra.mxu0 0.0
        %1704 = vmatpush.msra.mxu0 0.0
        %1705 = vmatpush.msra.mxu0 0.0
        %1706 = vmatpush.msra.mxu0 0.0
        %1707 = vmatpush.msra.mxu0 0.0
        %1708 = vmatpush.msra.mxu0 0.0
        %1709 = vmatpush.msra.mxu0 0.0
        %1710 = vmatpush.msra.mxu0 0.0
        %1711 = vmatpush.msra.mxu0 0.0
        %1712 = vmatpush.msra.mxu0 0.0
        %1713 = vmatpush.msra.mxu0 0.0
        %1714 = vmatpush.msra.mxu0 %v1691
        %1715 = vmatpush.msra.mxu0 %v1690
        %1716 = vmatpush.msra.mxu0 %v1689
        %1717 = vmatpush.msra.mxu0 %v1688
        %1718 = vmatmul.f32.gmra.mxu0 %v1697
        %v1719 = vpop.f32.mrf.mxu0
        %v1720 = vadd.f32 %v1694, %v1719
        %1721 = vmatmul.f32.gmra.mxu0 %v1700
        %v1722 = vpop.f32.mrf.mxu0
        %v1723 = vadd.f32 %v1694, %v1722
        %1724 = vdwg.mxu0
        %vm1725 = vcmp.gt.f32.partialorder %v1720, 0.0
        %vm1726 = vcmp.gt.f32.partialorder %v1723, 0.0
        %v1727 = vmul.f32 %v1720, 0.2
        %v1728 = vmul.f32 %v1723, 0.2
        %v1729 = vsel %vm1725, %v1720, %v1727
        %v1730 = vsel %vm1726, %v1723, %v1728
        %v1731 = vld [vmem:[#allocation11] sm:$0xff]
        %v1732 = vld [vmem:[#allocation11 + $0x8] sm:$0xff]
        %v1733 = vld [vmem:[#allocation11 + $0x10] sm:$0xff]
        %v1734 = vld [vmem:[#allocation11 + $0x18] sm:$0xff]
        %v1735 = vld [vmem:[%s61] sm:$0x1]
        %v1737 = vperm.slane %v1735, 0
        %v1740 = vsel %vm1259, %v1729, 0
        %v1743 = vsel %vm1259, %v1730, 0
        %1745 = vmatpush.msra.mxu0 0.0
        %1746 = vmatpush.msra.mxu0 0.0
        %1747 = vmatpush.msra.mxu0 0.0
        %1748 = vmatpush.msra.mxu0 0.0
        %1749 = vmatpush.msra.mxu0 0.0
        %1750 = vmatpush.msra.mxu0 0.0
        %1751 = vmatpush.msra.mxu0 0.0
        %1752 = vmatpush.msra.mxu0 0.0
        %1753 = vmatpush.msra.mxu0 0.0
        %1754 = vmatpush.msra.mxu0 0.0
        %1755 = vmatpush.msra.mxu0 0.0
        %1756 = vmatpush.msra.mxu0 0.0
        %1757 = vmatpush.msra.mxu0 %v1734
        %1758 = vmatpush.msra.mxu0 %v1733
        %1759 = vmatpush.msra.mxu0 %v1732
        %1760 = vmatpush.msra.mxu0 %v1731
        %1761 = vmatmul.f32.gmra.mxu0 %v1740
        %v1762 = vpop.f32.mrf.mxu0
        %v1763 = vadd.f32 %v1737, %v1762
        %1764 = vmatmul.f32.gmra.mxu0 %v1743
        %v1765 = vpop.f32.mrf.mxu0
        %v1766 = vadd.f32 %v1737, %v1765
        %1767 = vdwg.mxu0
        %v1768 = vadd.f32 %v1686, %v1763
        %v1769 = vadd.f32 %v1687, %v1766
        %v1770 = vld [vmem:[%s63] sm:$0xff]
        %v1771 = vld [vmem:[%s63 + $0x8] sm:$0xff]
        %v1772 = vld [vmem:[%s63 + $0x10] sm:$0xff]
        %v1773 = vld [vmem:[%s63 + $0x18] sm:$0xff]
        %v1774 = vld [vmem:[%s65] sm:$0x1]
        %v1776 = vperm.slane %v1774, 0
        %v1779 = vsel %vm1259, %v1768, 0
        %v1782 = vsel %vm1259, %v1769, 0
        %1784 = vmatpush.msra.mxu0 0.0
        %1785 = vmatpush.msra.mxu0 0.0
        %1786 = vmatpush.msra.mxu0 0.0
        %1787 = vmatpush.msra.mxu0 0.0
        %1788 = vmatpush.msra.mxu0 0.0
        %1789 = vmatpush.msra.mxu0 0.0
        %1790 = vmatpush.msra.mxu0 0.0
        %1791 = vmatpush.msra.mxu0 0.0
        %1792 = vmatpush.msra.mxu0 0.0
        %1793 = vmatpush.msra.mxu0 0.0
        %1794 = vmatpush.msra.mxu0 0.0
        %1795 = vmatpush.msra.mxu0 0.0
        %1796 = vmatpush.msra.mxu0 %v1773
        %1797 = vmatpush.msra.mxu0 %v1772
        %1798 = vmatpush.msra.mxu0 %v1771
        %1799 = vmatpush.msra.mxu0 %v1770
        %1800 = vmatmul.f32.gmra.mxu0 %v1779
        %v1801 = vpop.f32.mrf.mxu0
        %v1802 = vadd.f32 %v1776, %v1801
        %1803 = vmatmul.f32.gmra.mxu0 %v1782
        %v1804 = vpop.f32.mrf.mxu0
        %v1805 = vadd.f32 %v1776, %v1804
        %1806 = vdwg.mxu0
        %1807 = vst.msk [vmem:[%s1209] sm:$0xff] %vm1217, %v1802
        %1808 = vst.msk [vmem:[%s1209 + $0x8] sm:$0xff] %vm1217, %v1805
        %v1809 = vld [vmem:[%s67] sm:$0xff]
        %v1810 = vld [vmem:[%s67 + $0x8] sm:$0xff]
        %v1811 = vld [vmem:[%s67 + $0x10] sm:$0xff]
        %v1812 = vld [vmem:[%s67 + $0x18] sm:$0xff]
        %v1813 = vld [vmem:[%s69] sm:$0x1]
        %v1815 = vperm.slane %v1813, 0
        %v1817 = vsel %vm1259, %v1533, 0
        %1819 = vmatpush.msra.mxu0 0.0
        %1820 = vmatpush.msra.mxu0 0.0
        %1821 = vmatpush.msra.mxu0 0.0
        %1822 = vmatpush.msra.mxu0 0.0
        %1823 = vmatpush.msra.mxu0 0.0
        %1824 = vmatpush.msra.mxu0 0.0
        %1825 = vmatpush.msra.mxu0 0.0
        %1826 = vmatpush.msra.mxu0 0.0
        %1827 = vmatpush.msra.mxu0 0.0
        %1828 = vmatpush.msra.mxu0 0.0
        %1829 = vmatpush.msra.mxu0 0.0
        %1830 = vmatpush.msra.mxu0 0.0
        %1831 = vmatpush.msra.mxu0 %v1812
        %1832 = vmatpush.msra.mxu0 %v1811
        %1833 = vmatpush.msra.mxu0 %v1810
        %1834 = vmatpush.msra.mxu0 %v1809
        %1835 = vmatmul.f32.gmra.mxu0 %v1817
        %v1836 = vpop.f32.mrf.mxu0
        %v1837 = vadd.f32 %v1815, %v1836
        %1838 = vdwg.mxu0
        %vm1839 = vcmask 27648
        %1840 = vst.msk [vmem:[%s1199] sm:$0xf] %vm1839, %v1837
        %p1841 = scmp.lt.s32.totalorder %s92, 1
        %s1842 = scalar_select %p1841, %s92, 1
        %s1843 = smul.addr %s1842, 2
        %s1844 = smul.addr %s1843, 8
        %s1845 = scalar_lea.vmem %s71, %s1844
        %s1846 = sand.u32 %s866, 1
        %s1847 = scalar_lea.sflag [#allocation4], %s1846
        %s1848 = sand.u32 %s866, 1
        %s1849 = smul.addr %s1848, 4
        %s1850 = scalar_lea.vmem [#allocation13], %s1849
        // Predicated region
        $region185: #{tpu_custom_call.1} parent=159 // pred_check
          %p1851 = pneg %p850
        $region186: #{tpu_custom_call.1} parent=159 // pred_check_branch
          %1853 = sbr.rel (%p1851) target = $region188
        $region187: #{tpu_custom_call.1} parent=159 // pred_region
          _
        $region188: #{tpu_custom_call.1} parent=159 // pred_fallthru
          _
        // Predicated region
        $region189: #{tpu_custom_call.1} parent=159 // pred_check
          %p1854 = pneg %p876
        $region190: #{tpu_custom_call.1} parent=159 // pred_check_branch
          %1856 = sbr.rel (%p1854) target = $region192
        $region191: #{tpu_custom_call.1} parent=159 // pred_region
          %1858 = vsyncadd %s1847, 0
          %s1859 = smul.addr %s92, 4
          %s1860 = scalar_lea.hbm %s73, %s1859
          %s1862 = sshll.u32 %s1850, 4
          %s1863 = int_to_ptr.vmem [resolvable:$true] %s1862
          %s1864 = sshll.u32 %s1860, 4
          %s1865 = int_to_ptr.hbm [resolvable:$true] %s1864
          %1867 = dma.vmem_to_hbm [thread:$0]  %s1863, 64, %s1865, %s1847
        $region192: #{tpu_custom_call.1} parent=159 // pred_fallthru
          _
      $region160: #{tpu_custom_call.1} parent=5 // pred_fallthru
        _
      %p1868 = scmp.le.s32.totalorder 2, %s87
      // Predicated region
      $region193: #{tpu_custom_call.1} parent=5 // pred_check
        %p1869 = pneg %p1868
      $region194: #{tpu_custom_call.1} parent=5 // pred_check_branch
        %1871 = sbr.rel (%p1869) target = $region196
      $region195: #{tpu_custom_call.1} parent=5 // pred_region
        %s1872 = ssub.s32 %s87, 2
        // Predicated region
        $region197: #{tpu_custom_call.1} parent=195 // pred_check
          %p1873 = pneg %p856
        $region198: #{tpu_custom_call.1} parent=195 // pred_check_branch
          %1875 = sbr.rel (%p1873) target = $region200
        $region199: #{tpu_custom_call.1} parent=195 // pred_region
          %p1876 = scmp.lt.s32.totalorder %s93, 1
          %s1877 = scalar_select %p1876, %s93, 1
          %s1878 = smul.addr %s1877, 2
          %s1879 = smul.addr %s1878, 8
          %s1880 = scalar_lea.vmem %s71, %s1879
        $region200: #{tpu_custom_call.1} parent=195 // pred_fallthru
          _
        // Predicated region
        $region201: #{tpu_custom_call.1} parent=195 // pred_check
          %p1881 = pneg %p882
        $region202: #{tpu_custom_call.1} parent=195 // pred_check_branch
          %1883 = sbr.rel (%p1881) target = $region204
        $region203: #{tpu_custom_call.1} parent=195 // pred_region
          %s1884 = sand.u32 %s867, 1
          %s1885 = scalar_lea.sflag [#allocation4], %s1884
          %s1886 = sand.u32 %s867, 1
          %s1887 = smul.addr %s1886, 4
          %s1888 = scalar_lea.vmem [#allocation13], %s1887
          %1890 = dma.done %s1885, 64
        $region204: #{tpu_custom_call.1} parent=195 // pred_fallthru
          _
      $region196: #{tpu_custom_call.1} parent=5 // pred_fallthru
        _
    $region6: #{tpu_custom_call.1} parent=1 // loop_footer
      %s91 = sadd.s32 1, %s87
    $region7: #{tpu_custom_call.1} parent=1 // loop_footer_branch
      %86 = sbr.rel target = $region3
    $region8: #{tpu_custom_call.1} parent=1 // loop_exit
      _
    %1891 = vsyncpa [#allocation3], 1
    %s1892 = scalar_lea.sflag [#allocation3], 1
    %1893 = vsyncpa %s1892, 1
    %1894 = vsyncpa [#allocation6], 1
    %1895 = vsyncpa [#allocation9], 1
    %1896 = vsyncpa [#allocation12], 1
    %1897 = vsyncpa [#allocation4], 1
    %s1898 = scalar_lea.sflag [#allocation4], 1
    %1899 = vsyncpa %s1898, 1

</llo_original>
